<compile_context>
chip_gen: v7x
topology: tpu7x:2x2x1
jax: 0.10.0
libtpu: 0.0.40
codegen_flags: <defaults>
</compile_context>

<pallas_src>
import numpy as np
import jax
import jax.numpy as jnp
from jax import lax
from jax.experimental import pallas as pl
from jax.experimental.pallas import tpu as pltpu


def _round_up(x, m):
    return (x + m - 1) // m * m


def _make_kernel(cp_in, cp_out, row_w0, out_len_p, frame_len, cdt):
    """Fused sub-pixel conv1 + LeakyReLU + parity-decomposed conv2 + LeakyReLU.

    One image per grid step; all intermediates stay in VMEM.  Flat low-res
    "padded frame" layout: row width = W+2, H+2 rows (+ tail), channels on
    sublanes, flattened space on lanes.
    """
    f32 = jnp.float32
    head = row_w0 + 1                 # lanes before the interior window
    tail0 = head + out_len_p          # first lane after the interior window

    def kernel(x_ref, m_ref, w1_ref, b1_ref, w2_ref, b2_ref, o_ref, f_ref):
        # x_ref : (cp_in, frame_len)       padded low-res input frame
        # m_ref : (1, out_len_p)           interior mask (drops wrap/pad lanes)
        # w1_ref: (4*cp_out, 9*cp_in)      conv1 folded with x2-nearest upsample
        # b1_ref: (4*cp_out, 1)
        # w2_ref: (4*cp_out, 16*cp_out)    conv2 folded over parity planes
        # b2_ref: (4*cp_out, 1)
        # o_ref : (4*cp_out, out_len_p)    4 parity planes, lane-dense
        # f_ref : (4*cp_out, frame_len)    VMEM scratch: padded parity frames

        # ---- stage A: conv1 (+ upsample fold): one matmul, M = 4*cp_out ----
        x = x_ref[...]
        patches1 = jnp.concatenate(
            [x[:, dr * row_w0 + dc: dr * row_w0 + dc + out_len_p]
             for dr in range(3) for dc in range(3)], axis=0)   # (9*cp_in, out_len_p)
        h1 = jnp.dot(w1_ref[...], patches1,
                     preferred_element_type=f32)               # (4*cp_out, out_len_p)
        h1 = h1 + b1_ref[...]
        h1 = jnp.maximum(h1, 0.2 * h1)                          # LeakyReLU(0.2)

        # ---- re-embed the 4 parity planes into padded low-res frames ------
        # zero only the border lanes (every step: safe under megacore), then a
        # single narrow masked interior write.
        f_ref[:, :head] = jnp.zeros((4 * cp_out, head), cdt)
        f_ref[:, tail0:] = jnp.zeros((4 * cp_out, frame_len - tail0), cdt)
        f_ref[:, head:tail0] = (h1 * m_ref[...]).astype(cdt)

        # ---- stage B: conv2 over the 4 parity planes: one matmul ----------
        slabs = []
        for py in range(2):
            for px in range(2):
                p = py * 2 + px
                for a in range(2):
                    for b in range(2):
                        off = (a + 1 - py) * row_w0 + (b + 1 - px)
                        slabs.append(f_ref[p * cp_out:(p + 1) * cp_out,
                                           off: off + out_len_p])
        patches2 = jnp.concatenate(slabs, axis=0)               # (16*cp_out, out_len_p)
        h2 = jnp.dot(w2_ref[...], patches2, preferred_element_type=f32)
        h2 = h2 + b2_ref[...]
        h2 = jnp.maximum(h2, 0.2 * h2)
        o_ref[...] = h2.astype(o_ref.dtype)

    return kernel


def _fold_weights(w1, b1, w2, b2, cin, cout, cp_in, cp_out, cdt):
    """Fold (upsample o conv1) and (parity-decomposed conv2) weight matrices."""
    f32 = jnp.float32
    hp = lax.Precision.HIGHEST

    # conv1 folded with nearest-x2: output parity (py,px) reads a 3x3 tap bank
    # on the ORIGINAL frame; each original tap (kh,kw) lands in exactly one
    # (dr,dc) slot per parity:  dr = floor((py-1+kh)/2)+1, dc likewise.
    sel1 = np.zeros((4, 3, 3, 3, 3), np.float32)
    for py in range(2):
        for px in range(2):
            p = py * 2 + px
            for kh in range(3):
                dr = (py - 1 + kh) // 2 + 1
                for kw in range(3):
                    dc = (px - 1 + kw) // 2 + 1
                    sel1[p, dr, dc, kh, kw] = 1.0
    w1p = jnp.pad(w1.astype(f32),
                  ((0, cp_out - cout), (0, cp_in - cin), (0, 0), (0, 0)))
    w1f = jnp.einsum('pqrkl,ockl->poqrc', jnp.asarray(sel1), w1p,
                     precision=hp).reshape(4 * cp_out, 9 * cp_in)

    # conv2 over parity planes: output parity (qy,qx), super-patch slot
    # s = (py,px,a,b) corresponds to original tap kh = 2a-py-qy+1 (if 0..2).
    sel2 = np.zeros((4, 16, 3, 3), np.float32)
    for qy in range(2):
        for qx in range(2):
            q = qy * 2 + qx
            for py in range(2):
                for px in range(2):
                    for a in range(2):
                        for b in range(2):
                            s = ((py * 2 + px) * 2 + a) * 2 + b
                            kh = 2 * a - py - qy + 1
                            kw = 2 * b - px - qx + 1
                            if 0 <= kh <= 2 and 0 <= kw <= 2:
                                sel2[q, s, kh, kw] = 1.0
    w2p = jnp.pad(w2.astype(f32),
                  ((0, cp_out - cout), (0, cp_out - cout), (0, 0), (0, 0)))
    w2f = jnp.einsum('qskl,ockl->qosc', jnp.asarray(sel2), w2p,
                     precision=hp).reshape(4 * cp_out, 16 * cp_out)

    b1t = jnp.tile(jnp.pad(b1.astype(f32), (0, cp_out - cout)), 4).reshape(4 * cp_out, 1)
    b2t = jnp.tile(jnp.pad(b2.astype(f32), (0, cp_out - cout)), 4).reshape(4 * cp_out, 1)
    return w1f.astype(cdt), b1t, w2f.astype(cdt), b2t


def double_conv_up(x_nchw, w1, b1, w2, b2, *, use_bf16=False):
    """Forward pass matching the PyTorch module.  Input/output are NCHW f32."""
    n, cin, h, w = x_nchw.shape
    cout = w1.shape[0]
    f32 = jnp.float32
    cdt = jnp.bfloat16 if use_bf16 else f32     # matmul-operand dtype (f32 acc)

    cp_in = _round_up(cin, 8)                   # sublane-aligned channel pads
    cp_out = _round_up(cout, 8)

    row_w0 = w + 2                              # padded low-res row width
    out_len = h * row_w0                        # meaningful output lanes
    out_len_p = _round_up(out_len, 128)         # lane-dense (unmasked stores)
    frame_len = _round_up(out_len_p + 2 * row_w0 + 2, 128)

    # --- VMEM gate: per-step working set now scales O(C*H*W), not O(H^2W^2).
    isz = 2 if use_bf16 else 4
    vmem_est = ((2 * cp_in * frame_len                    # input block (x2 buf)
                 + 4 * cp_out * frame_len                 # parity-frame scratch
                 + (9 * cp_in + 16 * cp_out) * out_len_p  # patch matrices
                 ) * isz
                + 2 * 4 * cp_out * out_len_p * 4)         # output block (x2 buf)
    if vmem_est > 12 * (1 << 20):
        # TODO(synk): strip-tile the flat frame (row strips + 1-row halo) for
        # large spatial sizes instead of whole-image frames.
        raise NotImplementedError(
            f"per-step VMEM estimate {vmem_est / 2**20:.1f} MiB too large; "
            "strip-tile the spatial frame for inputs this big")

    # --- tiny host-side prep: padded low-res frame, mask, folded weights ---
    q = jnp.arange(frame_len)
    r, s = q // row_w0, q % row_w0
    interior = (r >= 1) & (r <= h) & (s >= 1) & (s <= w)
    src = jnp.clip((r - 1) * w + (s - 1), 0, h * w - 1)
    x_flat = x_nchw.astype(f32).reshape(n, cin, h * w)
    frames = jnp.where(interior[None, None, :], x_flat[:, :, src], 0.0)
    frames = jnp.pad(frames, ((0, 0), (0, cp_in - cin), (0, 0))).astype(cdt)

    q2 = jnp.arange(out_len_p)
    mask = ((q2 < out_len) & (q2 % row_w0 < w)).astype(cdt).reshape(1, out_len_p)

    w1f, b1t, w2f, b2t = _fold_weights(w1, b1, w2, b2, cin, cout,
                                       cp_in, cp_out, cdt)

    kernel = _make_kernel(cp_in, cp_out, row_w0, out_len_p, frame_len, cdt)

    out = pl.pallas_call(
        kernel,
        out_shape=jax.ShapeDtypeStruct((n, 4 * cp_out, out_len_p), f32),
        grid=(n,),
        in_specs=[
            pl.BlockSpec((None, cp_in, frame_len), lambda i: (i, 0, 0)),
            # constant-index operands (total < 30 KB, double-buffer cost ~0):
            pl.BlockSpec((1, out_len_p), lambda i: (0, 0)),
            pl.BlockSpec((4 * cp_out, 9 * cp_in), lambda i: (0, 0)),
            pl.BlockSpec((4 * cp_out, 1), lambda i: (0, 0)),
            pl.BlockSpec((4 * cp_out, 16 * cp_out), lambda i: (0, 0)),
            pl.BlockSpec((4 * cp_out, 1), lambda i: (0, 0)),
        ],
        out_specs=pl.BlockSpec((None, 4 * cp_out, out_len_p), lambda i: (i, 0, 0)),
        scratch_shapes=[pltpu.VMEM((4 * cp_out, frame_len), cdt)],
        compiler_params=pltpu.CompilerParams(
            dimension_semantics=("parallel",)),   # 2 steps -> both v7x TCs busy
    )(frames, mask, w1f, b1t, w2f, b2t)

    # (n, 4*cp_out, out_len_p) -> NCHW: drop lane/channel padding & wrap cols,
    # then interleave the 4 parity planes back to 2H x 2W.
    out = out.reshape(n, 4, cp_out, out_len_p)[:, :, :cout, :out_len]
    out = out.reshape(n, 2, 2, cout, h, row_w0)[..., :w]
    out = out.transpose(0, 3, 4, 1, 5, 2).reshape(n, cout, 2 * h, 2 * w)
    return out


def _reference_forward(x_nchw, w1, b1, w2, b2):
    """Plain-JAX (XLA conv) reference for numerical validation."""
    xu = jnp.repeat(jnp.repeat(x_nchw, 2, axis=2), 2, axis=3)

    def conv(t, wgt, b):
        y = lax.conv_general_dilated(
            t, wgt, window_strides=(1, 1), padding="SAME",
            dimension_numbers=("NCHW", "OIHW", "NCHW"),
            precision=lax.Precision.HIGHEST)
        y = y + b[None, :, None, None]
        return jnp.where(y > 0, y, 0.2 * y)

    return conv(conv(xu, w1, b1), w2, b2)


if __name__ == "__main__":
    key = jax.random.PRNGKey(0)
    k_x, k_w1, k_b1, k_w2, k_b2 = jax.random.split(key, 5)

    N, in_ch, out_ch, H, W = 2, 4, 8, 16, 16
    x = jax.random.normal(k_x, (N, in_ch, H, W), dtype=jnp.float32)

    # deterministic parameter init (PyTorch Conv2d weight shapes: OIHW)
    w1 = 0.1 * jax.random.normal(k_w1, (out_ch, in_ch, 3, 3), dtype=jnp.float32)
    b1 = 0.1 * jax.random.normal(k_b1, (out_ch,), dtype=jnp.float32)
    w2 = 0.1 * jax.random.normal(k_w2, (out_ch, out_ch, 3, 3), dtype=jnp.float32)
    b2 = 0.1 * jax.random.normal(k_b2, (out_ch,), dtype=jnp.float32)

    fwd = jax.jit(double_conv_up)
    out = fwd(x, w1, b1, w2, b2)
    out = jax.block_until_ready(out)

    ref = _reference_forward(x, w1, b1, w2, b2)
    assert out.shape == (N, out_ch, 2 * H, 2 * W), out.shape
    assert jnp.allclose(out, ref, atol=2e-4, rtol=2e-4), (
        float(jnp.max(jnp.abs(out - ref))))

    print("KERNEL_OK")
</pallas_src>

<mosaic_0001>
module attributes {stable_mosaic.version = 11 : i64} {
  func.func @kernel(%arg0: i32, %arg1: memref<1x8x512xf32, #tpu.memory_space<vmem>>, %arg2: memref<1x384xf32, #tpu.memory_space<vmem>>, %arg3: memref<32x72xf32, #tpu.memory_space<vmem>>, %arg4: memref<32x1xf32, #tpu.memory_space<vmem>>, %arg5: memref<32x128xf32, #tpu.memory_space<vmem>>, %arg6: memref<32x1xf32, #tpu.memory_space<vmem>>, %arg7: memref<1x32x384xf32, #tpu.memory_space<vmem>>, %arg8: memref<32x512xf32, #tpu.memory_space<vmem>>) attributes {dimension_semantics = [#tpu.dimension_semantics<parallel>], iteration_bounds = array<i64: 2>, scalar_prefetch = 0 : i64, scratch_operands = 1 : i64, tpu.core_type = #tpu.core_type<tc>, window_params = [{transform_indices = @transform_0, window_bounds = array<i64: 1, 8, 512>}, {pipeline_mode = #tpu.pipeline_mode<synchronous>, transform_indices = @transform_1, window_bounds = array<i64: 1, 384>}, {pipeline_mode = #tpu.pipeline_mode<synchronous>, transform_indices = @transform_2, window_bounds = array<i64: 32, 72>}, {pipeline_mode = #tpu.pipeline_mode<synchronous>, transform_indices = @transform_3, window_bounds = array<i64: 32, 1>}, {pipeline_mode = #tpu.pipeline_mode<synchronous>, transform_indices = @transform_4, window_bounds = array<i64: 32, 128>}, {pipeline_mode = #tpu.pipeline_mode<synchronous>, transform_indices = @transform_5, window_bounds = array<i64: 32, 1>}, {transform_indices = @transform_6, window_bounds = array<i64: 1, 32, 384>}]} {
    %c0 = arith.constant 0 : index
    %c0_0 = arith.constant 0 : index
    %c0_1 = arith.constant 0 : index
    %0 = vector.load %arg1[%c0, %c0_0, %c0_1] : memref<1x8x512xf32, #tpu.memory_space<vmem>>, vector<1x8x512xf32>
    %1 = vector.shape_cast %0 : vector<1x8x512xf32> to vector<8x512xf32>
    %2 = vector.extract_strided_slice %1 {offsets = [0, 0], sizes = [8, 384], strides = [1, 1]} : vector<8x512xf32> to vector<8x384xf32>
    %3 = vector.extract_strided_slice %1 {offsets = [0, 1], sizes = [8, 384], strides = [1, 1]} : vector<8x512xf32> to vector<8x384xf32>
    %4 = vector.extract_strided_slice %1 {offsets = [0, 2], sizes = [8, 384], strides = [1, 1]} : vector<8x512xf32> to vector<8x384xf32>
    %5 = vector.extract_strided_slice %1 {offsets = [0, 18], sizes = [8, 384], strides = [1, 1]} : vector<8x512xf32> to vector<8x384xf32>
    %6 = vector.extract_strided_slice %1 {offsets = [0, 19], sizes = [8, 384], strides = [1, 1]} : vector<8x512xf32> to vector<8x384xf32>
    %7 = vector.extract_strided_slice %1 {offsets = [0, 20], sizes = [8, 384], strides = [1, 1]} : vector<8x512xf32> to vector<8x384xf32>
    %8 = vector.extract_strided_slice %1 {offsets = [0, 36], sizes = [8, 384], strides = [1, 1]} : vector<8x512xf32> to vector<8x384xf32>
    %9 = vector.extract_strided_slice %1 {offsets = [0, 37], sizes = [8, 384], strides = [1, 1]} : vector<8x512xf32> to vector<8x384xf32>
    %10 = vector.extract_strided_slice %1 {offsets = [0, 38], sizes = [8, 384], strides = [1, 1]} : vector<8x512xf32> to vector<8x384xf32>
    %11 = tpu.concatenate %2, %3, %4, %5, %6, %7, %8, %9, %10 in 0 : vector<8x384xf32>, vector<8x384xf32>, vector<8x384xf32>, vector<8x384xf32>, vector<8x384xf32>, vector<8x384xf32>, vector<8x384xf32>, vector<8x384xf32>, vector<8x384xf32> -> vector<72x384xf32>
    %c0_2 = arith.constant 0 : index
    %c0_3 = arith.constant 0 : index
    %12 = vector.load %arg3[%c0_2, %c0_3] : memref<32x72xf32, #tpu.memory_space<vmem>>, vector<32x72xf32>
    %cst = arith.constant dense<0.000000e+00> : vector<32x384xf32>
    %13 = tpu.matmul %12, %11, %cst {dimension_numbers = #tpu.dot_dimension_numbers<[1], [0], [0], [1], [0, 0, 1, 1], [], []>} : vector<32x72xf32>, vector<72x384xf32>, vector<32x384xf32> -> vector<32x384xf32>
    %c0_4 = arith.constant 0 : index
    %c0_5 = arith.constant 0 : index
    %14 = vector.load %arg4[%c0_4, %c0_5] : memref<32x1xf32, #tpu.memory_space<vmem>>, vector<32x1xf32>
    %15 = vector.broadcast %14 : vector<32x1xf32> to vector<32x384xf32>
    %16 = arith.addf %13, %15 : vector<32x384xf32>
    %cst_6 = arith.constant 2.000000e-01 : f32
    %17 = vector.broadcast %cst_6 : f32 to vector<32x384xf32>
    %18 = arith.mulf %17, %16 : vector<32x384xf32>
    %19 = arith.maximumf %16, %18 : vector<32x384xf32>
    %cst_7 = arith.constant 0.000000e+00 : f32
    %20 = vector.broadcast %cst_7 : f32 to vector<32x19xf32>
    %c0_8 = arith.constant 0 : index
    %c0_9 = arith.constant 0 : index
    %21 = vector.load %arg8[%c0_8, %c0_9] : memref<32x512xf32, #tpu.memory_space<vmem>>, vector<32x19xf32>
    tpu.vector_store %arg8[%c0_8, %c0_9], %20 {strides = array<i32>} : memref<32x512xf32, #tpu.memory_space<vmem>>, vector<32x19xf32>,
    %cst_10 = arith.constant 0.000000e+00 : f32
    %22 = vector.broadcast %cst_10 : f32 to vector<32x109xf32>
    %c0_11 = arith.constant 0 : index
    %c403 = arith.constant 403 : index
    %23 = vector.load %arg8[%c0_11, %c403] : memref<32x512xf32, #tpu.memory_space<vmem>>, vector<32x109xf32>
    tpu.vector_store %arg8[%c0_11, %c403], %22 {strides = array<i32>} : memref<32x512xf32, #tpu.memory_space<vmem>>, vector<32x109xf32>,
    %c0_12 = arith.constant 0 : index
    %c0_13 = arith.constant 0 : index
    %24 = vector.load %arg2[%c0_12, %c0_13] : memref<1x384xf32, #tpu.memory_space<vmem>>, vector<1x384xf32>
    %25 = vector.broadcast %24 : vector<1x384xf32> to vector<32x384xf32>
    %26 = arith.mulf %19, %25 : vector<32x384xf32>
    %c0_14 = arith.constant 0 : index
    %c19 = arith.constant 19 : index
    %27 = vector.load %arg8[%c0_14, %c19] : memref<32x512xf32, #tpu.memory_space<vmem>>, vector<32x384xf32>
    tpu.vector_store %arg8[%c0_14, %c19], %26 {strides = array<i32>} : memref<32x512xf32, #tpu.memory_space<vmem>>, vector<32x384xf32>,
    %c0_15 = arith.constant 0 : index
    %c19_16 = arith.constant 19 : index
    %28 = vector.load %arg8[%c0_15, %c19_16] : memref<32x512xf32, #tpu.memory_space<vmem>>, vector<8x384xf32>
    %c0_17 = arith.constant 0 : index
    %c20 = arith.constant 20 : index
    %29 = vector.load %arg8[%c0_17, %c20] : memref<32x512xf32, #tpu.memory_space<vmem>>, vector<8x384xf32>
    %c0_18 = arith.constant 0 : index
    %c37 = arith.constant 37 : index
    %30 = vector.load %arg8[%c0_18, %c37] : memref<32x512xf32, #tpu.memory_space<vmem>>, vector<8x384xf32>
    %c0_19 = arith.constant 0 : index
    %c38 = arith.constant 38 : index
    %31 = vector.load %arg8[%c0_19, %c38] : memref<32x512xf32, #tpu.memory_space<vmem>>, vector<8x384xf32>
    %c8 = arith.constant 8 : index
    %c18 = arith.constant 18 : index
    %32 = vector.load %arg8[%c8, %c18] : memref<32x512xf32, #tpu.memory_space<vmem>>, vector<8x384xf32>
    %c8_20 = arith.constant 8 : index
    %c19_21 = arith.constant 19 : index
    %33 = vector.load %arg8[%c8_20, %c19_21] : memref<32x512xf32, #tpu.memory_space<vmem>>, vector<8x384xf32>
    %c8_22 = arith.constant 8 : index
    %c36 = arith.constant 36 : index
    %34 = vector.load %arg8[%c8_22, %c36] : memref<32x512xf32, #tpu.memory_space<vmem>>, vector<8x384xf32>
    %c8_23 = arith.constant 8 : index
    %c37_24 = arith.constant 37 : index
    %35 = vector.load %arg8[%c8_23, %c37_24] : memref<32x512xf32, #tpu.memory_space<vmem>>, vector<8x384xf32>
    %c16 = arith.constant 16 : index
    %c1 = arith.constant 1 : index
    %36 = vector.load %arg8[%c16, %c1] : memref<32x512xf32, #tpu.memory_space<vmem>>, vector<8x384xf32>
    %c16_25 = arith.constant 16 : index
    %c2 = arith.constant 2 : index
    %37 = vector.load %arg8[%c16_25, %c2] : memref<32x512xf32, #tpu.memory_space<vmem>>, vector<8x384xf32>
    %c16_26 = arith.constant 16 : index
    %c19_27 = arith.constant 19 : index
    %38 = vector.load %arg8[%c16_26, %c19_27] : memref<32x512xf32, #tpu.memory_space<vmem>>, vector<8x384xf32>
    %c16_28 = arith.constant 16 : index
    %c20_29 = arith.constant 20 : index
    %39 = vector.load %arg8[%c16_28, %c20_29] : memref<32x512xf32, #tpu.memory_space<vmem>>, vector<8x384xf32>
    %c24 = arith.constant 24 : index
    %c0_30 = arith.constant 0 : index
    %40 = vector.load %arg8[%c24, %c0_30] : memref<32x512xf32, #tpu.memory_space<vmem>>, vector<8x384xf32>
    %c24_31 = arith.constant 24 : index
    %c1_32 = arith.constant 1 : index
    %41 = vector.load %arg8[%c24_31, %c1_32] : memref<32x512xf32, #tpu.memory_space<vmem>>, vector<8x384xf32>
    %c24_33 = arith.constant 24 : index
    %c18_34 = arith.constant 18 : index
    %42 = vector.load %arg8[%c24_33, %c18_34] : memref<32x512xf32, #tpu.memory_space<vmem>>, vector<8x384xf32>
    %c24_35 = arith.constant 24 : index
    %c19_36 = arith.constant 19 : index
    %43 = vector.load %arg8[%c24_35, %c19_36] : memref<32x512xf32, #tpu.memory_space<vmem>>, vector<8x384xf32>
    %44 = tpu.concatenate %28, %29, %30, %31, %32, %33, %34, %35, %36, %37, %38, %39, %40, %41, %42, %43 in 0 : vector<8x384xf32>, vector<8x384xf32>, vector<8x384xf32>, vector<8x384xf32>, vector<8x384xf32>, vector<8x384xf32>, vector<8x384xf32>, vector<8x384xf32>, vector<8x384xf32>, vector<8x384xf32>, vector<8x384xf32>, vector<8x384xf32>, vector<8x384xf32>, vector<8x384xf32>, vector<8x384xf32>, vector<8x384xf32> -> vector<128x384xf32>
    %c0_37 = arith.constant 0 : index
    %c0_38 = arith.constant 0 : index
    %45 = vector.load %arg5[%c0_37, %c0_38] : memref<32x128xf32, #tpu.memory_space<vmem>>, vector<32x128xf32>
    %cst_39 = arith.constant dense<0.000000e+00> : vector<32x384xf32>
    %46 = tpu.matmul %45, %44, %cst_39 {dimension_numbers = #tpu.dot_dimension_numbers<[1], [0], [0], [1], [0, 0, 1, 1], [], []>} : vector<32x128xf32>, vector<128x384xf32>, vector<32x384xf32> -> vector<32x384xf32>
    %c0_40 = arith.constant 0 : index
    %c0_41 = arith.constant 0 : index
    %47 = vector.load %arg6[%c0_40, %c0_41] : memref<32x1xf32, #tpu.memory_space<vmem>>, vector<32x1xf32>
    %48 = vector.broadcast %47 : vector<32x1xf32> to vector<32x384xf32>
    %49 = arith.addf %46, %48 : vector<32x384xf32>
    %cst_42 = arith.constant 2.000000e-01 : f32
    %50 = vector.broadcast %cst_42 : f32 to vector<32x384xf32>
    %51 = arith.mulf %50, %49 : vector<32x384xf32>
    %52 = arith.maximumf %49, %51 : vector<32x384xf32>
    %c0_43 = arith.constant 0 : index
    %c0_44 = arith.constant 0 : index
    %c0_45 = arith.constant 0 : index
    %53 = vector.load %arg7[%c0_43, %c0_44, %c0_45] : memref<1x32x384xf32, #tpu.memory_space<vmem>>, vector<1x32x384xf32>
    %54 = vector.shape_cast %53 : vector<1x32x384xf32> to vector<32x384xf32>
    %55 = vector.shape_cast %52 : vector<32x384xf32> to vector<1x32x384xf32>
    tpu.vector_store %arg7[%c0_43, %c0_44, %c0_45], %55 {strides = array<i32>} : memref<1x32x384xf32, #tpu.memory_space<vmem>>, vector<1x32x384xf32>,
    return
  }
  func.func @transform_0(%arg0: i32) -> (i32, i32, i32) {
    %c0_i32 = arith.constant 0 : i32
    %c0_i32_0 = arith.constant 0 : i32
    %c0_i32_1 = arith.constant 0 : i32
    return %arg0, %c0_i32, %c0_i32_0 : i32, i32, i32
  }
  func.func @transform_1(%arg0: i32) -> (i32, i32) {
    %c0_i32 = arith.constant 0 : i32
    %c0_i32_0 = arith.constant 0 : i32
    %c0_i32_1 = arith.constant 0 : i32
    return %c0_i32, %c0_i32_0 : i32, i32
  }
  func.func @transform_2(%arg0: i32) -> (i32, i32) {
    %c0_i32 = arith.constant 0 : i32
    %c0_i32_0 = arith.constant 0 : i32
    %c0_i32_1 = arith.constant 0 : i32
    return %c0_i32, %c0_i32_0 : i32, i32
  }
  func.func @transform_3(%arg0: i32) -> (i32, i32) {
    %c0_i32 = arith.constant 0 : i32
    %c0_i32_0 = arith.constant 0 : i32
    %c0_i32_1 = arith.constant 0 : i32
    return %c0_i32, %c0_i32_0 : i32, i32
  }
  func.func @transform_4(%arg0: i32) -> (i32, i32) {
    %c0_i32 = arith.constant 0 : i32
    %c0_i32_0 = arith.constant 0 : i32
    %c0_i32_1 = arith.constant 0 : i32
    return %c0_i32, %c0_i32_0 : i32, i32
  }
  func.func @transform_5(%arg0: i32) -> (i32, i32) {
    %c0_i32 = arith.constant 0 : i32
    %c0_i32_0 = arith.constant 0 : i32
    %c0_i32_1 = arith.constant 0 : i32
    return %c0_i32, %c0_i32_0 : i32, i32
  }
  func.func @transform_6(%arg0: i32) -> (i32, i32, i32) {
    %c0_i32 = arith.constant 0 : i32
    %c0_i32_0 = arith.constant 0 : i32
    %c0_i32_1 = arith.constant 0 : i32
    return %arg0, %c0_i32, %c0_i32_0 : i32, i32, i32
  }
}

</mosaic_0001>

<llo_original>
// kernel: tile.13
$region0: #{tile.13}
  #allocation0 [shape = 's32[1]{0}', space=sflag, size = 0x4, scoped, tag = 'scoped memory for tile.13']
  %s0 = inlined_call_operand.vmem [shape: f32[8], index: 0, kind: input, shape index: {}]
  %s1 = inlined_call_operand.vmem [shape: f32[4,8], index: 1, kind: output, shape index: {}]
  // Predicated region
  $region2: #{tile.13} parent=0 // pred_check
    _
  $region3: #{tile.13} parent=0 // pred_check_branch
    %3 = sbr.rel (0) target = $region5
  $region4: #{tile.13} parent=0 // pred_region
    _
  $region5: #{tile.13} parent=0 // pred_fallthru
    _
  %v4 = vld [vmem:[%s0] ss:$0 sm:$0xff]
  %5 = vst [vmem:[%s1] sm:$0xf] %v4

// kernel: tile.1
$region0: #{tile.1}
  %s0 = inlined_call_operand.vmem [shape: f32[4,8], index: 0, kind: input, shape index: {}]
  %s1 = inlined_call_operand.vmem [shape: f32[32,1], index: 1, kind: output, shape index: {}]
  $region1: #{tile.1} parent=0
    #allocation0 [shape = 'u8[4096]{0}', space=vmem, size = 0x1000, scoped, tag = 'scoped mem for input reshape']
    %s3 = sshllo.u32 0, 4
    %v4 = vld [vmem:[%s0] sm:%s3]
    %5 = vst [vmem:[#allocation0] sm:%s3] %v4
    %v6 = vld [vmem:[#allocation0] sm:$0xf]
    %vm7 = vcmask 7168
    %8 = vst.msk [vmem:[%s1] ss:$8 sm:$0xf] %vm7, %v6
    %v9 = vld [vmem:[#allocation0] sm:$0xf]
    %10 = vrot.lane.b32.xlu0 %v9, 127
    %v11 = vpop.permute.xlu0 %10
    %vm12 = vcmask 7168
    %s13 = scalar_lea.vmem %s1, 1
    %14 = vst.msk [vmem:[%s13] ss:$8 sm:$0xf] %vm12, %v11
    %v15 = vld [vmem:[#allocation0] sm:$0xf]
    %16 = vrot.lane.b32.xlu0 %v15, 126
    %v17 = vpop.permute.xlu0 %16
    %vm18 = vcmask 7168
    %s19 = scalar_lea.vmem %s1, 2
    %20 = vst.msk [vmem:[%s19] ss:$8 sm:$0xf] %vm18, %v17
    %v21 = vld [vmem:[#allocation0] sm:$0xf]
    %22 = vrot.lane.b32.xlu0 %v21, 125
    %v23 = vpop.permute.xlu0 %22
    %vm24 = vcmask 7168
    %s25 = scalar_lea.vmem %s1, 3
    %26 = vst.msk [vmem:[%s25] ss:$8 sm:$0xf] %vm24, %v23
    %v27 = vld [vmem:[#allocation0] sm:$0xf]
    %28 = vrot.lane.b32.xlu0 %v27, 124
    %v29 = vpop.permute.xlu0 %28
    %vm30 = vcmask 7168
    %s31 = scalar_lea.vmem %s1, 4
    %32 = vst.msk [vmem:[%s31] ss:$8 sm:$0xf] %vm30, %v29
    %v33 = vld [vmem:[#allocation0] sm:$0xf]
    %34 = vrot.lane.b32.xlu0 %v33, 123
    %v35 = vpop.permute.xlu0 %34
    %vm36 = vcmask 7168
    %s37 = scalar_lea.vmem %s1, 5
    %38 = vst.msk [vmem:[%s37] ss:$8 sm:$0xf] %vm36, %v35
    %v39 = vld [vmem:[#allocation0] sm:$0xf]
    %40 = vrot.lane.b32.xlu0 %v39, 122
    %v41 = vpop.permute.xlu0 %40
    %vm42 = vcmask 7168
    %s43 = scalar_lea.vmem %s1, 6
    %44 = vst.msk [vmem:[%s43] ss:$8 sm:$0xf] %vm42, %v41
    %v45 = vld [vmem:[#allocation0] sm:$0xf]
    %46 = vrot.lane.b32.xlu0 %v45, 121
    %v47 = vpop.permute.xlu0 %46
    %vm48 = vcmask 7168
    %s49 = scalar_lea.vmem %s1, 7
    %50 = vst.msk [vmem:[%s49] ss:$8 sm:$0xf] %vm48, %v47

// kernel: double_conv_up.1
$region0: #{double_conv_up.1}
  #allocation0 [shape = 'u32[]', space=smem, size = 0x4, offset = 0x4, fixed_abs, tag = 'smem constant byte address 0x4 - core index']
  #allocation1 [shape = 'u32[144,128]{1,0:T(1,128)}', space=vmem, size = 0x12000, scoped, tag = 'internal scratch']
  #allocation2 [shape = 'f32[32,512]{1,0:T(8,128)}', space=vmem, size = 0x10000, scoped, tag = 'scratch operand']
  %s0 = inlined_call_operand.vmem [shape: f32[2,8,512], index: 0, kind: input, shape index: {}]
  %s1 = inlined_call_operand.vmem [shape: f32[1,384], index: 1, kind: input, shape index: {}]
  %s2 = inlined_call_operand.vmem [shape: f32[32,72], index: 2, kind: input, shape index: {}]
  %s3 = inlined_call_operand.vmem [shape: f32[32,1], index: 3, kind: input, shape index: {}]
  %s4 = inlined_call_operand.vmem [shape: f32[32,128], index: 4, kind: input, shape index: {}]
  %s5 = inlined_call_operand.vmem [shape: f32[32,1], index: 5, kind: input, shape index: {}]
  %s6 = inlined_call_operand.vmem [shape: f32[2,32,384], index: 6, kind: output, shape index: {}]
  %s7 = sld [smem:[#allocation0]]
  $region57: #{double_conv_up.1} parent=0
    _
  %s9 = ssub.s32 1, %s7
  %s10 = scalar_select 0, %s9, %s7
  loop: start=0, step=1, limit=4
  $region2: #{double_conv_up.1} parent=0 // loop_pre_header
    _
  $region3: #{double_conv_up.1} parent=0 // loop_header
    %s12 = sphi 0, %s16
    %p13 = scmp.ge.s32.totalorder %s12, 4
    %s22 = sphi 0, %s24
    %s25 = sphi 0, %s22
    %s26 = sphi 0, %s25
    %s42 = sphi 0, %s26
    %s46 = sphi 0, %s46
    %s48 = sphi 0, %s46
    %s49 = sphi 0, %s48
    %s63 = sphi 0, %s49
    %s67 = sphi 0, %s67
    %s69 = sphi 0, %s67
    %s70 = sphi 0, %s69
    %s84 = sphi 0, %s70
    %s88 = sphi 0, %s88
    %s90 = sphi 0, %s88
    %s91 = sphi 0, %s90
    %s105 = sphi 0, %s91
    %s109 = sphi 0, %s109
    %s111 = sphi 0, %s109
    %s112 = sphi 0, %s111
    %s126 = sphi 0, %s112
    %s130 = sphi 0, %s130
    %s132 = sphi 0, %s130
    %s133 = sphi 0, %s132
    %s147 = sphi 0, %s133
    %s153 = sphi 0, %s155
    %s156 = sphi 0, %s153
    %s157 = sphi 0, %s156
    %s173 = sphi 0, %s157
  $region4: #{double_conv_up.1} parent=0 // loop_header_branch
    %15 = sbr.rel (%p13) target = $region8
  $region5: #{double_conv_up.1} parent=0 // loop_body
    %s17 = ssub.s32 %s12, 1
    %s18 = ssub.s32 %s12, 2
    %s19 = sadd.s32 %s12, 1
    %s20 = ssub.s32 %s12, %s19
    %p21 = scmp.eq.s32.totalorder %s20, 0
    %s23 = sadd.s32 %s22, 1
    %s24 = scalar_select %p21, %s22, %s23
    %p27 = pneg %p21
    %p28 = scmp.eq.s32.totalorder %s12, 1
    %p29 = por %p27, %p28
    %p30 = scmp.ne.s32.totalorder %s22, %s25
    %p31 = scmp.eq.s32.totalorder %s12, 0
    %p32 = por %p30, %p31
    %p33 = scmp.ne.s32.totalorder %s22, %s25
    %p34 = scmp.eq.s32.totalorder %s17, 1
    %p35 = por %p33, %p34
    %p36 = scmp.ne.s32.totalorder %s25, %s26
    %p37 = scmp.eq.s32.totalorder %s17, 0
    %p38 = por %p36, %p37
    %p39 = scmp.ne.s32.totalorder %s25, %s26
    %p40 = scmp.eq.s32.totalorder %s18, 1
    %p41 = por %p39, %p40
    %p43 = scmp.ne.s32.totalorder %s26, %s42
    %p44 = scmp.eq.s32.totalorder %s18, 0
    %p45 = por %p43, %p44
    %s47 = sadd.s32 %s46, 1
    %p50 = scmp.eq.s32.totalorder %s12, 1
    %p51 = scmp.ne.s32.totalorder %s46, %s48
    %p52 = scmp.eq.s32.totalorder %s12, 0
    %p53 = por %p51, %p52
    %p54 = scmp.ne.s32.totalorder %s46, %s48
    %p55 = scmp.eq.s32.totalorder %s17, 1
    %p56 = por %p54, %p55
    %p57 = scmp.ne.s32.totalorder %s48, %s49
    %p58 = scmp.eq.s32.totalorder %s17, 0
    %p59 = por %p57, %p58
    %p60 = scmp.ne.s32.totalorder %s48, %s49
    %p61 = scmp.eq.s32.totalorder %s18, 1
    %p62 = por %p60, %p61
    %p64 = scmp.ne.s32.totalorder %s49, %s63
    %p65 = scmp.eq.s32.totalorder %s18, 0
    %p66 = por %p64, %p65
    %s68 = sadd.s32 %s67, 1
    %p71 = scmp.eq.s32.totalorder %s12, 1
    %p72 = scmp.ne.s32.totalorder %s67, %s69
    %p73 = scmp.eq.s32.totalorder %s12, 0
    %p74 = por %p72, %p73
    %p75 = scmp.ne.s32.totalorder %s67, %s69
    %p76 = scmp.eq.s32.totalorder %s17, 1
    %p77 = por %p75, %p76
    %p78 = scmp.ne.s32.totalorder %s69, %s70
    %p79 = scmp.eq.s32.totalorder %s17, 0
    %p80 = por %p78, %p79
    %p81 = scmp.ne.s32.totalorder %s69, %s70
    %p82 = scmp.eq.s32.totalorder %s18, 1
    %p83 = por %p81, %p82
    %p85 = scmp.ne.s32.totalorder %s70, %s84
    %p86 = scmp.eq.s32.totalorder %s18, 0
    %p87 = por %p85, %p86
    %s89 = sadd.s32 %s88, 1
    %p92 = scmp.eq.s32.totalorder %s12, 1
    %p93 = scmp.ne.s32.totalorder %s88, %s90
    %p94 = scmp.eq.s32.totalorder %s12, 0
    %p95 = por %p93, %p94
    %p96 = scmp.ne.s32.totalorder %s88, %s90
    %p97 = scmp.eq.s32.totalorder %s17, 1
    %p98 = por %p96, %p97
    %p99 = scmp.ne.s32.totalorder %s90, %s91
    %p100 = scmp.eq.s32.totalorder %s17, 0
    %p101 = por %p99, %p100
    %p102 = scmp.ne.s32.totalorder %s90, %s91
    %p103 = scmp.eq.s32.totalorder %s18, 1
    %p104 = por %p102, %p103
    %p106 = scmp.ne.s32.totalorder %s91, %s105
    %p107 = scmp.eq.s32.totalorder %s18, 0
    %p108 = por %p106, %p107
    %s110 = sadd.s32 %s109, 1
    %p113 = scmp.eq.s32.totalorder %s12, 1
    %p114 = scmp.ne.s32.totalorder %s109, %s111
    %p115 = scmp.eq.s32.totalorder %s12, 0
    %p116 = por %p114, %p115
    %p117 = scmp.ne.s32.totalorder %s109, %s111
    %p118 = scmp.eq.s32.totalorder %s17, 1
    %p119 = por %p117, %p118
    %p120 = scmp.ne.s32.totalorder %s111, %s112
    %p121 = scmp.eq.s32.totalorder %s17, 0
    %p122 = por %p120, %p121
    %p123 = scmp.ne.s32.totalorder %s111, %s112
    %p124 = scmp.eq.s32.totalorder %s18, 1
    %p125 = por %p123, %p124
    %p127 = scmp.ne.s32.totalorder %s112, %s126
    %p128 = scmp.eq.s32.totalorder %s18, 0
    %p129 = por %p127, %p128
    %s131 = sadd.s32 %s130, 1
    %p134 = scmp.eq.s32.totalorder %s12, 1
    %p135 = scmp.ne.s32.totalorder %s130, %s132
    %p136 = scmp.eq.s32.totalorder %s12, 0
    %p137 = por %p135, %p136
    %p138 = scmp.ne.s32.totalorder %s130, %s132
    %p139 = scmp.eq.s32.totalorder %s17, 1
    %p140 = por %p138, %p139
    %p141 = scmp.ne.s32.totalorder %s132, %s133
    %p142 = scmp.eq.s32.totalorder %s17, 0
    %p143 = por %p141, %p142
    %p144 = scmp.ne.s32.totalorder %s132, %s133
    %p145 = scmp.eq.s32.totalorder %s18, 1
    %p146 = por %p144, %p145
    %p148 = scmp.ne.s32.totalorder %s133, %s147
    %p149 = scmp.eq.s32.totalorder %s18, 0
    %p150 = por %p148, %p149
    %s151 = ssub.s32 %s12, %s19
    %p152 = scmp.eq.s32.totalorder %s151, 0
    %s154 = sadd.s32 %s153, 1
    %s155 = scalar_select %p152, %s153, %s154
    %p158 = pneg %p152
    %p159 = scmp.eq.s32.totalorder %s12, 1
    %p160 = por %p158, %p159
    %p161 = scmp.ne.s32.totalorder %s153, %s156
    %p162 = scmp.eq.s32.totalorder %s12, 0
    %p163 = por %p161, %p162
    %p164 = scmp.ne.s32.totalorder %s153, %s156
    %p165 = scmp.eq.s32.totalorder %s17, 1
    %p166 = por %p164, %p165
    %p167 = scmp.ne.s32.totalorder %s156, %s157
    %p168 = scmp.eq.s32.totalorder %s17, 0
    %p169 = por %p167, %p168
    %p170 = scmp.ne.s32.totalorder %s156, %s157
    %p171 = scmp.eq.s32.totalorder %s18, 1
    %p172 = por %p170, %p171
    %p174 = scmp.ne.s32.totalorder %s157, %s173
    %p175 = scmp.eq.s32.totalorder %s18, 0
    %p176 = por %p174, %p175
    %p177 = scmp.le.s32.totalorder 1, %s12
    %p178 = scmp.lt.s32.totalorder %s12, 3
    %p179 = pnand %p177, %p178
    %p180 = pneg %p179
    // Predicated region
    $region9: #{double_conv_up.1} parent=5 // pred_check
      _
    $region10: #{double_conv_up.1} parent=5 // pred_check_branch
      %182 = sbr.rel (%p179) target = $region12
    $region11: #{double_conv_up.1} parent=5 // pred_region
      %s183 = ssub.s32 %s12, 1
      // Predicated region
      $region13: #{double_conv_up.1} parent=11 // pred_check
        %p184 = pneg %p59
      $region14: #{double_conv_up.1} parent=11 // pred_check_branch
        %186 = sbr.rel (%p184) target = $region16
      $region15: #{double_conv_up.1} parent=11 // pred_region
        _
      $region16: #{double_conv_up.1} parent=11 // pred_fallthru
        _
      // Predicated region
      $region17: #{double_conv_up.1} parent=11 // pred_check
        %p187 = pneg %p80
      $region18: #{double_conv_up.1} parent=11 // pred_check_branch
        %189 = sbr.rel (%p187) target = $region20
      $region19: #{double_conv_up.1} parent=11 // pred_region
        _
      $region20: #{double_conv_up.1} parent=11 // pred_fallthru
        _
      // Predicated region
      $region21: #{double_conv_up.1} parent=11 // pred_check
        %p190 = pneg %p101
      $region22: #{double_conv_up.1} parent=11 // pred_check_branch
        %192 = sbr.rel (%p190) target = $region24
      $region23: #{double_conv_up.1} parent=11 // pred_region
        _
      $region24: #{double_conv_up.1} parent=11 // pred_fallthru
        _
      // Predicated region
      $region25: #{double_conv_up.1} parent=11 // pred_check
        %p193 = pneg %p122
      $region26: #{double_conv_up.1} parent=11 // pred_check_branch
        %195 = sbr.rel (%p193) target = $region28
      $region27: #{double_conv_up.1} parent=11 // pred_region
        _
      $region28: #{double_conv_up.1} parent=11 // pred_fallthru
        _
      // Predicated region
      $region29: #{double_conv_up.1} parent=11 // pred_check
        %p196 = pneg %p143
      $region30: #{double_conv_up.1} parent=11 // pred_check_branch
        %198 = sbr.rel (%p196) target = $region32
      $region31: #{double_conv_up.1} parent=11 // pred_region
        _
      $region32: #{double_conv_up.1} parent=11 // pred_fallthru
        _
    $region12: #{double_conv_up.1} parent=5 // pred_fallthru
      _
    %p199 = scmp.lt.s32.totalorder %s12, 2
    // Predicated region
    $region33: #{double_conv_up.1} parent=5 // pred_check
      %p200 = pneg %p199
    $region34: #{double_conv_up.1} parent=5 // pred_check_branch
      %202 = sbr.rel (%p200) target = $region36
    $region35: #{double_conv_up.1} parent=5 // pred_region
      // Predicated region
      $region37: #{double_conv_up.1} parent=35 // pred_check
        %p203 = pneg %p32
      $region38: #{double_conv_up.1} parent=35 // pred_check_branch
        %205 = sbr.rel (%p203) target = $region40
      $region39: #{double_conv_up.1} parent=35 // pred_region
        %p206 = scmp.lt.s32.totalorder %s12, 1
        %s207 = scalar_select %p206, %s12, 1
        %s208 = smul.addr %s207, 4
        %s209 = smul.addr %s208, 8
        %s210 = scalar_lea.vmem %s0, %s209
      $region40: #{double_conv_up.1} parent=35 // pred_fallthru
        _
    $region36: #{double_conv_up.1} parent=5 // pred_fallthru
      _
    %p211 = scmp.le.s32.totalorder 1, %s12
    %p212 = scmp.lt.s32.totalorder %s12, 3
    %p213 = pnand %p211, %p212
    %p214 = pneg %p213
    // Predicated region
    $region41: #{double_conv_up.1} parent=5 // pred_check
      _
    $region42: #{double_conv_up.1} parent=5 // pred_check_branch
      %216 = sbr.rel (%p213) target = $region44
    $region43: #{double_conv_up.1} parent=5 // pred_region
      %s217 = ssub.s32 %s12, 1
      %p218 = scmp.lt.s32.totalorder %s17, 1
      %s219 = scalar_select %p218, %s17, 1
      %s220 = smul.addr %s219, 4
      %s221 = smul.addr %s220, 8
      %s222 = scalar_lea.vmem %s0, %s221
      %p223 = pneg %p38
      %p224 = pneg %p35
      %p225 = pneg %p59
      %p226 = pneg %p56
      %p227 = pneg %p80
      %p228 = pneg %p77
      %p229 = pneg %p101
      %p230 = pneg %p98
      %p231 = pneg %p122
      %p232 = pneg %p119
      %p233 = pneg %p143
      %p234 = pneg %p140
      %p235 = pneg %p169
      %p236 = pneg %p166
      %p237 = scmp.lt.s32.totalorder %s17, 1
      %s238 = scalar_select %p237, %s17, 1
      %s239 = smul.addr %s238, 12
      %s240 = smul.addr %s239, 8
      %s241 = scalar_lea.vmem %s6, %s240
      %p242 = scmp.lt.s32.totalorder %s17, 1
      %s243 = scalar_select %p242, %s17, 1
      %s244 = smul.addr %s243, 4
      %s245 = smul.addr %s244, 8
      %s246 = scalar_lea.vmem %s0, %s245
      %p247 = scmp.lt.s32.totalorder %s17, 1
      %s248 = scalar_select %p247, %s17, 1
      %s249 = smul.addr %s248, 12
      %s250 = smul.addr %s249, 8
      %s251 = scalar_lea.vmem %s6, %s250
      %v252 = vld [vmem:[%s246] sm:$0xff]
      %v253 = vld [vmem:[%s246 + $0x8] sm:$0xff]
      %v254 = vld [vmem:[%s246 + $0x10] sm:$0xff]
      %v255 = vld [vmem:[%s246 + $0x18] sm:$0xff]
      %260 = vrot.lane.b32.xlu0 %v252, 127
      %v261 = vpop.permute.xlu0 %260
      %262 = vrot.lane.b32.xlu0 %v253, 127
      %v263 = vpop.permute.xlu0 %262
      %264 = vrot.lane.b32.xlu0 %v254, 127
      %v265 = vpop.permute.xlu0 %264
      %266 = vrot.lane.b32.xlu0 %v255, 127
      %v267 = vpop.permute.xlu0 %266
      %vm268 = vcmask 1039360
      %v269 = vsel %vm268, %v261, %v263
      %v270 = vsel %vm268, %v263, %v265
      %v271 = vsel %vm268, %v265, %v267
      %275 = vrot.lane.b32.xlu0 %v252, 126
      %v276 = vpop.permute.xlu0 %275
      %277 = vrot.lane.b32.xlu0 %v253, 126
      %v278 = vpop.permute.xlu0 %277
      %279 = vrot.lane.b32.xlu0 %v254, 126
      %v280 = vpop.permute.xlu0 %279
      %281 = vrot.lane.b32.xlu0 %v255, 126
      %v282 = vpop.permute.xlu0 %281
      %vm283 = vcmask 1031168
      %v284 = vsel %vm283, %v276, %v278
      %v285 = vsel %vm283, %v278, %v280
      %v286 = vsel %vm283, %v280, %v282
      %290 = vrot.lane.b32.xlu0 %v252, 110
      %v291 = vpop.permute.xlu0 %290
      %292 = vrot.lane.b32.xlu0 %v253, 110
      %v293 = vpop.permute.xlu0 %292
      %294 = vrot.lane.b32.xlu0 %v254, 110
      %v295 = vpop.permute.xlu0 %294
      %296 = vrot.lane.b32.xlu0 %v255, 110
      %v297 = vpop.permute.xlu0 %296
      %vm298 = vcmask 900096
      %v299 = vsel %vm298, %v291, %v293
      %v300 = vsel %vm298, %v293, %v295
      %v301 = vsel %vm298, %v295, %v297
      %305 = vrot.lane.b32.xlu0 %v252, 109
      %v306 = vpop.permute.xlu0 %305
      %307 = vrot.lane.b32.xlu0 %v253, 109
      %v308 = vpop.permute.xlu0 %307
      %309 = vrot.lane.b32.xlu0 %v254, 109
      %v310 = vpop.permute.xlu0 %309
      %311 = vrot.lane.b32.xlu0 %v255, 109
      %v312 = vpop.permute.xlu0 %311
      %vm313 = vcmask 891904
      %v314 = vsel %vm313, %v306, %v308
      %v315 = vsel %vm313, %v308, %v310
      %v316 = vsel %vm313, %v310, %v312
      %320 = vrot.lane.b32.xlu0 %v252, 108
      %v321 = vpop.permute.xlu0 %320
      %322 = vrot.lane.b32.xlu0 %v253, 108
      %v323 = vpop.permute.xlu0 %322
      %324 = vrot.lane.b32.xlu0 %v254, 108
      %v325 = vpop.permute.xlu0 %324
      %326 = vrot.lane.b32.xlu0 %v255, 108
      %v327 = vpop.permute.xlu0 %326
      %vm328 = vcmask 883712
      %v329 = vsel %vm328, %v321, %v323
      %v330 = vsel %vm328, %v323, %v325
      %v331 = vsel %vm328, %v325, %v327
      %335 = vrot.lane.b32.xlu0 %v252, 92
      %v336 = vpop.permute.xlu0 %335
      %337 = vrot.lane.b32.xlu0 %v253, 92
      %v338 = vpop.permute.xlu0 %337
      %339 = vrot.lane.b32.xlu0 %v254, 92
      %v340 = vpop.permute.xlu0 %339
      %341 = vrot.lane.b32.xlu0 %v255, 92
      %v342 = vpop.permute.xlu0 %341
      %vm343 = vcmask 752640
      %v344 = vsel %vm343, %v336, %v338
      %v345 = vsel %vm343, %v338, %v340
      %v346 = vsel %vm343, %v340, %v342
      %350 = vrot.lane.b32.xlu0 %v252, 91
      %v351 = vpop.permute.xlu0 %350
      %352 = vrot.lane.b32.xlu0 %v253, 91
      %v353 = vpop.permute.xlu0 %352
      %354 = vrot.lane.b32.xlu0 %v254, 91
      %v355 = vpop.permute.xlu0 %354
      %356 = vrot.lane.b32.xlu0 %v255, 91
      %v357 = vpop.permute.xlu0 %356
      %vm358 = vcmask 744448
      %v359 = vsel %vm358, %v351, %v353
      %v360 = vsel %vm358, %v353, %v355
      %v361 = vsel %vm358, %v355, %v357
      %365 = vrot.lane.b32.xlu0 %v252, 90
      %v366 = vpop.permute.xlu0 %365
      %367 = vrot.lane.b32.xlu0 %v253, 90
      %v368 = vpop.permute.xlu0 %367
      %369 = vrot.lane.b32.xlu0 %v254, 90
      %v370 = vpop.permute.xlu0 %369
      %371 = vrot.lane.b32.xlu0 %v255, 90
      %v372 = vpop.permute.xlu0 %371
      %vm373 = vcmask 736256
      %v374 = vsel %vm373, %v366, %v368
      %v375 = vsel %vm373, %v368, %v370
      %v376 = vsel %vm373, %v370, %v372
      %v380 = vld [vmem:[%s2] sm:$0xff]
      %v381 = vld [vmem:[%s2 + $0x8] sm:$0xff]
      %v382 = vld [vmem:[%s2 + $0x10] sm:$0xff]
      %v383 = vld [vmem:[%s2 + $0x18] sm:$0xff]
      %v384 = vld [vmem:[%s3] sm:$0xff]
      %v385 = vld [vmem:[%s3 + $0x8] sm:$0xff]
      %v386 = vld [vmem:[%s3 + $0x10] sm:$0xff]
      %v387 = vld [vmem:[%s3 + $0x18] sm:$0xff]
      %389 = vset.pattern.permute.xlu0 0
      %390 = vperm.xlu0 %389, %v384
      %v391 = vpop.permute.xlu0 %390
      %394 = vset.pattern.permute.xlu0 0
      %395 = vperm.xlu0 %394, %v385
      %v396 = vpop.permute.xlu0 %395
      %399 = vset.pattern.permute.xlu0 0
      %400 = vperm.xlu0 %399, %v386
      %v401 = vpop.permute.xlu0 %400
      %404 = vset.pattern.permute.xlu0 0
      %405 = vperm.xlu0 %404, %v387
      %v406 = vpop.permute.xlu0 %405
      %vm408 = vcmask 588800
      %v410 = vsel %vm408, %v380, 0
      %v413 = vsel %vm408, %v381, 0
      %v416 = vsel %vm408, %v382, 0
      %v419 = vsel %vm408, %v383, 0
      %421 = vmatprep.subr.mxu0 %v253
      %422 = vmatpush1.msra.mxu0 %v252
      %423 = vmatprep.subr.mxu0 %v270
      %424 = vmatpush1.msra.mxu0 %v269
      %425 = vmatprep.subr.mxu0 %v285
      %426 = vmatpush1.msra.mxu0 %v284
      %427 = vmatprep.subr.mxu0 %v300
      %428 = vmatpush1.msra.mxu0 %v299
      %429 = vmatprep.subr.mxu0 %v315
      %430 = vmatpush1.msra.mxu0 %v314
      %431 = vmatprep.subr.mxu0 %v330
      %432 = vmatpush1.msra.mxu0 %v329
      %433 = vmatprep.subr.mxu0 %v345
      %434 = vmatpush1.msra.mxu0 %v344
      %435 = vmatprep.subr.mxu0 %v360
      %436 = vmatpush1.msra.mxu0 %v359
      %437 = vmatprep.subr.mxu0 %v375
      %438 = vmatpush1.msra.mxu0 %v374
      %439 = vmatprep.subr.mxu0 0.0
      %440 = vmatpush1.msra.mxu0 0.0
      %441 = vmatprep.subr.mxu0 0.0
      %442 = vmatpush1.msra.mxu0 0.0
      %443 = vmatprep.subr.mxu0 0.0
      %444 = vmatpush1.msra.mxu0 0.0
      %445 = vmatprep.subr.mxu0 0.0
      %446 = vmatpush1.msra.mxu0 0.0
      %447 = vmatprep.subr.mxu0 0.0
      %448 = vmatpush1.msra.mxu0 0.0
      %449 = vmatprep.subr.mxu0 0.0
      %450 = vmatpush1.msra.mxu0 0.0
      %451 = vmatprep.subr.mxu0 0.0
      %452 = vmatpush1.msra.mxu0 0.0
      %453 = vmatprep.subr.mxu0 0.0
      %454 = vmatpush1.msra.mxu0 0.0
      %455 = vmatprep.subr.mxu0 0.0
      %456 = vmatpush1.msra.mxu0 0.0
      %457 = vmatprep.subr.mxu0 0.0
      %458 = vmatpush1.msra.mxu0 0.0
      %459 = vmatprep.subr.mxu0 0.0
      %460 = vmatpush1.msra.mxu0 0.0
      %461 = vmatprep.subr.mxu0 0.0
      %462 = vmatpush1.msra.mxu0 0.0
      %463 = vmatprep.subr.mxu0 0.0
      %464 = vmatpush1.msra.mxu0 0.0
      %465 = vmatprep.subr.mxu0 0.0
      %466 = vmatpush1.msra.mxu0 0.0
      %467 = vmatprep.subr.mxu0 0.0
      %468 = vmatpush1.msra.mxu0 0.0
      %469 = vmatprep.subr.mxu0 0.0
      %470 = vmatpush1.msra.mxu0 0.0
      %471 = vmatprep.subr.mxu0 0.0
      %472 = vmatpush1.msra.mxu0 0.0
      %473 = vmatprep.subr.mxu0 0.0
      %474 = vmatpush1.msra.mxu0 0.0
      %475 = vmatprep.subr.mxu0 0.0
      %476 = vmatpush1.msra.mxu0 0.0
      %477 = vmatprep.subr.mxu0 0.0
      %478 = vmatpush1.msra.mxu0 0.0
      %479 = vmatprep.subr.mxu0 0.0
      %480 = vmatpush1.msra.mxu0 0.0
      %481 = vmatprep.subr.mxu0 0.0
      %482 = vmatpush1.msra.mxu0 0.0
      %483 = vmatprep.subr.mxu0 0.0
      %484 = vmatpush1.msra.mxu0 0.0
      %485 = vmatprep.mubr.f32.mxu0 0.0
      %486 = vmatmul.mubr.f32.gmra.mrb[0].mxu0 %v410
      %v487 = vpop.f32.mrb[0].mxu0
      %v488 = vadd.f32 %v391, %v487
      %v489 = vpop.f32.mrb[0].mxu0
      %v490 = vadd.f32 %v391, %v489
      %491 = vmatprep.mubr.f32.mxu0 0.0
      %492 = vmatmul.mubr.f32.gmra.mrb[0].mxu0 %v413
      %v493 = vpop.f32.mrb[0].mxu0
      %v494 = vadd.f32 %v396, %v493
      %v495 = vpop.f32.mrb[0].mxu0
      %v496 = vadd.f32 %v396, %v495
      %497 = vmatprep.mubr.f32.mxu0 0.0
      %498 = vmatmul.mubr.f32.gmra.mrb[0].mxu0 %v416
      %v499 = vpop.f32.mrb[0].mxu0
      %v500 = vadd.f32 %v401, %v499
      %v501 = vpop.f32.mrb[0].mxu0
      %v502 = vadd.f32 %v401, %v501
      %503 = vmatprep.mubr.f32.mxu0 0.0
      %504 = vmatmul.mubr.f32.gmra.mrb[0].mxu0 %v419
      %v505 = vpop.f32.mrb[0].mxu0
      %v506 = vadd.f32 %v406, %v505
      %v507 = vpop.f32.mrb[0].mxu0
      %v508 = vadd.f32 %v406, %v507
      %509 = vdwg.mxu0
      %510 = vmatprep.subr.mxu0 0.0
      %511 = vmatpush1.msra.mxu0 %v254
      %512 = vmatprep.subr.mxu0 0.0
      %513 = vmatpush1.msra.mxu0 %v271
      %514 = vmatprep.subr.mxu0 0.0
      %515 = vmatpush1.msra.mxu0 %v286
      %516 = vmatprep.subr.mxu0 0.0
      %517 = vmatpush1.msra.mxu0 %v301
      %518 = vmatprep.subr.mxu0 0.0
      %519 = vmatpush1.msra.mxu0 %v316
      %520 = vmatprep.subr.mxu0 0.0
      %521 = vmatpush1.msra.mxu0 %v331
      %522 = vmatprep.subr.mxu0 0.0
      %523 = vmatpush1.msra.mxu0 %v346
      %524 = vmatprep.subr.mxu0 0.0
      %525 = vmatpush1.msra.mxu0 %v361
      %526 = vmatprep.subr.mxu0 0.0
      %527 = vmatpush1.msra.mxu0 %v376
      %528 = vmatprep.subr.mxu0 0.0
      %529 = vmatpush1.msra.mxu0 0.0
      %530 = vmatprep.subr.mxu0 0.0
      %531 = vmatpush1.msra.mxu0 0.0
      %532 = vmatprep.subr.mxu0 0.0
      %533 = vmatpush1.msra.mxu0 0.0
      %534 = vmatprep.subr.mxu0 0.0
      %535 = vmatpush1.msra.mxu0 0.0
      %536 = vmatprep.subr.mxu0 0.0
      %537 = vmatpush1.msra.mxu0 0.0
      %538 = vmatprep.subr.mxu0 0.0
      %539 = vmatpush1.msra.mxu0 0.0
      %540 = vmatprep.subr.mxu0 0.0
      %541 = vmatpush1.msra.mxu0 0.0
      %542 = vmatprep.subr.mxu0 0.0
      %543 = vmatpush1.msra.mxu0 0.0
      %544 = vmatprep.subr.mxu0 0.0
      %545 = vmatpush1.msra.mxu0 0.0
      %546 = vmatprep.subr.mxu0 0.0
      %547 = vmatpush1.msra.mxu0 0.0
      %548 = vmatprep.subr.mxu0 0.0
      %549 = vmatpush1.msra.mxu0 0.0
      %550 = vmatprep.subr.mxu0 0.0
      %551 = vmatpush1.msra.mxu0 0.0
      %552 = vmatprep.subr.mxu0 0.0
      %553 = vmatpush1.msra.mxu0 0.0
      %554 = vmatprep.subr.mxu0 0.0
      %555 = vmatpush1.msra.mxu0 0.0
      %556 = vmatprep.subr.mxu0 0.0
      %557 = vmatpush1.msra.mxu0 0.0
      %558 = vmatprep.subr.mxu0 0.0
      %559 = vmatpush1.msra.mxu0 0.0
      %560 = vmatprep.subr.mxu0 0.0
      %561 = vmatpush1.msra.mxu0 0.0
      %562 = vmatprep.subr.mxu0 0.0
      %563 = vmatpush1.msra.mxu0 0.0
      %564 = vmatprep.subr.mxu0 0.0
      %565 = vmatpush1.msra.mxu0 0.0
      %566 = vmatprep.subr.mxu0 0.0
      %567 = vmatpush1.msra.mxu0 0.0
      %568 = vmatprep.subr.mxu0 0.0
      %569 = vmatpush1.msra.mxu0 0.0
      %570 = vmatprep.subr.mxu0 0.0
      %571 = vmatpush1.msra.mxu0 0.0
      %572 = vmatprep.subr.mxu0 0.0
      %573 = vmatpush1.msra.mxu0 0.0
      %574 = vmatprep.mubr.f32.mxu0 0.0
      %575 = vmatmul.mubr.f32.gmra.mrb[0].mxu0 %v410
      %v576 = vpop.f32.mrb[0].mxu0
      %v577 = vadd.f32 %v391, %v576
      %v578 = vpop.f32.mrb[0].mxu0
      %579 = vmatprep.mubr.f32.mxu0 0.0
      %580 = vmatmul.mubr.f32.gmra.mrb[0].mxu0 %v413
      %v581 = vpop.f32.mrb[0].mxu0
      %v582 = vadd.f32 %v396, %v581
      %v583 = vpop.f32.mrb[0].mxu0
      %584 = vmatprep.mubr.f32.mxu0 0.0
      %585 = vmatmul.mubr.f32.gmra.mrb[0].mxu0 %v416
      %v586 = vpop.f32.mrb[0].mxu0
      %v587 = vadd.f32 %v401, %v586
      %v588 = vpop.f32.mrb[0].mxu0
      %589 = vmatprep.mubr.f32.mxu0 0.0
      %590 = vmatmul.mubr.f32.gmra.mrb[0].mxu0 %v419
      %v591 = vpop.f32.mrb[0].mxu0
      %v592 = vadd.f32 %v406, %v591
      %v593 = vpop.f32.mrb[0].mxu0
      %594 = vdwg.mxu0
      %v595 = vmul.f32 %v488, 0.2
      %v596 = vmul.f32 %v490, 0.2
      %v597 = vmul.f32 %v577, 0.2
      %v598 = vmul.f32 %v494, 0.2
      %v599 = vmul.f32 %v496, 0.2
      %v600 = vmul.f32 %v582, 0.2
      %v601 = vmul.f32 %v500, 0.2
      %v602 = vmul.f32 %v502, 0.2
      %v603 = vmul.f32 %v587, 0.2
      %v604 = vmul.f32 %v506, 0.2
      %v605 = vmul.f32 %v508, 0.2
      %v606 = vmul.f32 %v592, 0.2
      %v607 = vmax.f32 %v488, %v595
      %v608 = vmax.f32 %v490, %v596
      %v609 = vmax.f32 %v577, %v597
      %v610 = vmax.f32 %v494, %v598
      %v611 = vmax.f32 %v496, %v599
      %v612 = vmax.f32 %v582, %v600
      %v613 = vmax.f32 %v500, %v601
      %v614 = vmax.f32 %v502, %v602
      %v615 = vmax.f32 %v587, %v603
      %v616 = vmax.f32 %v506, %v604
      %v617 = vmax.f32 %v508, %v605
      %v618 = vmax.f32 %v592, %v606
      %vm619 = vcmask 154624
      %620 = vst.msk [vmem:[#allocation2] sm:$0xff] %vm619, 0.0
      %621 = vst.msk [vmem:[#allocation2 + $0x20] sm:$0xff] %vm619, 0.0
      %622 = vst.msk [vmem:[#allocation2 + $0x40] sm:$0xff] %vm619, 0.0
      %623 = vst.msk [vmem:[#allocation2 + $0x60] sm:$0xff] %vm619, 0.0
      %vm624 = vcmask 1047704
      %625 = vst.msk [vmem:[#allocation2 + $0x18] sm:$0xff] %vm624, 0.0
      %626 = vst.msk [vmem:[#allocation2 + $0x38] sm:$0xff] %vm624, 0.0
      %627 = vst.msk [vmem:[#allocation2 + $0x58] sm:$0xff] %vm624, 0.0
      %628 = vst.msk [vmem:[#allocation2 + $0x78] sm:$0xff] %vm624, 0.0
      %v629 = vld [vmem:[%s1] sm:$0x7]
      %v631 = vlaneseq
      %v632 = vshrl.u32 %v631, 7
      %v633 = vsub.s32 0, %v632
      %v634 = vrot.slane %v629, %v633
      %v635 = vlaneseq
      %v636 = vshrl.u32 %v635, 7
      %v637 = vsub.s32 1, %v636
      %v638 = vrot.slane %v629, %v637
      %v639 = vlaneseq
      %v640 = vshrl.u32 %v639, 7
      %v641 = vsub.s32 2, %v640
      %v642 = vrot.slane %v629, %v641
      %v646 = vmul.f32 %v607, %v634
      %v647 = vmul.f32 %v608, %v638
      %v648 = vmul.f32 %v609, %v642
      %v649 = vmul.f32 %v610, %v634
      %v650 = vmul.f32 %v611, %v638
      %v651 = vmul.f32 %v612, %v642
      %v652 = vmul.f32 %v613, %v634
      %v653 = vmul.f32 %v614, %v638
      %v654 = vmul.f32 %v615, %v642
      %v655 = vmul.f32 %v616, %v634
      %v656 = vmul.f32 %v617, %v638
      %v657 = vmul.f32 %v618, %v642
      %670 = vrot.lane.b32.xlu0 %v646, 19
      %v671 = vpop.permute.xlu0 %670
      %672 = vrot.lane.b32.xlu0 %v647, 19
      %v673 = vpop.permute.xlu0 %672
      %674 = vrot.lane.b32.xlu0 %v648, 19
      %v675 = vpop.permute.xlu0 %674
      %676 = vrot.lane.b32.xlu0 %v649, 19
      %v677 = vpop.permute.xlu0 %676
      %678 = vrot.lane.b32.xlu0 %v650, 19
      %v679 = vpop.permute.xlu0 %678
      %680 = vrot.lane.b32.xlu0 %v651, 19
      %v681 = vpop.permute.xlu0 %680
      %682 = vrot.lane.b32.xlu0 %v652, 19
      %v683 = vpop.permute.xlu0 %682
      %684 = vrot.lane.b32.xlu0 %v653, 19
      %v685 = vpop.permute.xlu0 %684
      %686 = vrot.lane.b32.xlu0 %v654, 19
      %v687 = vpop.permute.xlu0 %686
      %688 = vrot.lane.b32.xlu0 %v655, 19
      %v689 = vpop.permute.xlu0 %688
      %690 = vrot.lane.b32.xlu0 %v656, 19
      %v691 = vpop.permute.xlu0 %690
      %692 = vrot.lane.b32.xlu0 %v657, 19
      %v693 = vpop.permute.xlu0 %692
      %v694 = vsel %vm619, %v671, %v673
      %v695 = vsel %vm619, %v673, %v675
      %v696 = vsel %vm619, %v677, %v679
      %v697 = vsel %vm619, %v679, %v681
      %v698 = vsel %vm619, %v683, %v685
      %v699 = vsel %vm619, %v685, %v687
      %v700 = vsel %vm619, %v689, %v691
      %v701 = vsel %vm619, %v691, %v693
      %718 = vst.msk [vmem:[#allocation2] sm:$0xff] %vm624, %v671
      %719 = vst [vmem:[#allocation2 + $0x8] sm:$0xff] %v694
      %720 = vst [vmem:[#allocation2 + $0x10] sm:$0xff] %v695
      %721 = vst.msk [vmem:[#allocation2 + $0x18] sm:$0xff] %vm619, %v675
      %722 = vst.msk [vmem:[#allocation2 + $0x20] sm:$0xff] %vm624, %v677
      %723 = vst [vmem:[#allocation2 + $0x28] sm:$0xff] %v696
      %724 = vst [vmem:[#allocation2 + $0x30] sm:$0xff] %v697
      %725 = vst.msk [vmem:[#allocation2 + $0x38] sm:$0xff] %vm619, %v681
      %726 = vst.msk [vmem:[#allocation2 + $0x40] sm:$0xff] %vm624, %v683
      %727 = vst [vmem:[#allocation2 + $0x48] sm:$0xff] %v698
      %728 = vst [vmem:[#allocation2 + $0x50] sm:$0xff] %v699
      %729 = vst.msk [vmem:[#allocation2 + $0x58] sm:$0xff] %vm619, %v687
      %730 = vst.msk [vmem:[#allocation2 + $0x60] sm:$0xff] %vm624, %v689
      %731 = vst [vmem:[#allocation2 + $0x68] sm:$0xff] %v700
      %732 = vst [vmem:[#allocation2 + $0x70] sm:$0xff] %v701
      %733 = vst.msk [vmem:[#allocation2 + $0x78] sm:$0xff] %vm619, %v693
      %v734 = vld [vmem:[#allocation2] sm:$0xff]
      %v735 = vld [vmem:[#allocation2 + $0x8] sm:$0xff]
      %v736 = vld [vmem:[#allocation2 + $0x10] sm:$0xff]
      %v737 = vld [vmem:[#allocation2 + $0x18] sm:$0xff]
      %v738 = vld [vmem:[#allocation2 + $0x20] sm:$0xff]
      %v739 = vld [vmem:[#allocation2 + $0x28] sm:$0xff]
      %v740 = vld [vmem:[#allocation2 + $0x30] sm:$0xff]
      %v741 = vld [vmem:[#allocation2 + $0x38] sm:$0xff]
      %v742 = vld [vmem:[#allocation2 + $0x40] sm:$0xff]
      %v743 = vld [vmem:[#allocation2 + $0x48] sm:$0xff]
      %v744 = vld [vmem:[#allocation2 + $0x50] sm:$0xff]
      %v745 = vld [vmem:[#allocation2 + $0x58] sm:$0xff]
      %v746 = vld [vmem:[#allocation2 + $0x60] sm:$0xff]
      %v747 = vld [vmem:[#allocation2 + $0x68] sm:$0xff]
      %v748 = vld [vmem:[#allocation2 + $0x70] sm:$0xff]
      %v749 = vld [vmem:[#allocation2 + $0x60] sm:$0xff]
      %v750 = vld [vmem:[#allocation2 + $0x68] sm:$0xff]
      %v751 = vld [vmem:[#allocation2 + $0x70] sm:$0xff]
      %v752 = vld [vmem:[#allocation2 + $0x78] sm:$0xff]
      %757 = vrot.lane.b32.xlu0 %v734, 127
      %v758 = vpop.permute.xlu0 %757
      %759 = vrot.lane.b32.xlu0 %v735, 127
      %v760 = vpop.permute.xlu0 %759
      %761 = vrot.lane.b32.xlu0 %v736, 127
      %v762 = vpop.permute.xlu0 %761
      %763 = vrot.lane.b32.xlu0 %v737, 127
      %v764 = vpop.permute.xlu0 %763
      %v765 = vsel %vm268, %v758, %v760
      %v766 = vsel %vm268, %v760, %v762
      %v767 = vsel %vm268, %v762, %v764
      %768 = vrot.lane.b32.xlu0 %v734, 110
      %v769 = vpop.permute.xlu0 %768
      %770 = vrot.lane.b32.xlu0 %v735, 110
      %v771 = vpop.permute.xlu0 %770
      %772 = vrot.lane.b32.xlu0 %v736, 110
      %v773 = vpop.permute.xlu0 %772
      %774 = vrot.lane.b32.xlu0 %v737, 110
      %v775 = vpop.permute.xlu0 %774
      %v776 = vsel %vm298, %v769, %v771
      %v777 = vsel %vm298, %v771, %v773
      %v778 = vsel %vm298, %v773, %v775
      %779 = vrot.lane.b32.xlu0 %v734, 109
      %v780 = vpop.permute.xlu0 %779
      %781 = vrot.lane.b32.xlu0 %v735, 109
      %v782 = vpop.permute.xlu0 %781
      %783 = vrot.lane.b32.xlu0 %v736, 109
      %v784 = vpop.permute.xlu0 %783
      %785 = vrot.lane.b32.xlu0 %v737, 109
      %v786 = vpop.permute.xlu0 %785
      %v787 = vsel %vm313, %v780, %v782
      %v788 = vsel %vm313, %v782, %v784
      %v789 = vsel %vm313, %v784, %v786
      %794 = vrot.lane.b32.xlu0 %v738, 1
      %v795 = vpop.permute.xlu0 %794
      %796 = vrot.lane.b32.xlu0 %v739, 1
      %v797 = vpop.permute.xlu0 %796
      %798 = vrot.lane.b32.xlu0 %v740, 1
      %v799 = vpop.permute.xlu0 %798
      %800 = vrot.lane.b32.xlu0 %v741, 1
      %v801 = vpop.permute.xlu0 %800
      %vm802 = vcmask 7168
      %v803 = vsel %vm802, %v795, %v797
      %v804 = vsel %vm802, %v797, %v799
      %v805 = vsel %vm802, %v799, %v801
      %806 = vrot.lane.b32.xlu0 %v738, 111
      %v807 = vpop.permute.xlu0 %806
      %808 = vrot.lane.b32.xlu0 %v739, 111
      %v809 = vpop.permute.xlu0 %808
      %810 = vrot.lane.b32.xlu0 %v740, 111
      %v811 = vpop.permute.xlu0 %810
      %812 = vrot.lane.b32.xlu0 %v741, 111
      %v813 = vpop.permute.xlu0 %812
      %vm814 = vcmask 908288
      %v815 = vsel %vm814, %v807, %v809
      %v816 = vsel %vm814, %v809, %v811
      %v817 = vsel %vm814, %v811, %v813
      %818 = vrot.lane.b32.xlu0 %v738, 110
      %v819 = vpop.permute.xlu0 %818
      %820 = vrot.lane.b32.xlu0 %v739, 110
      %v821 = vpop.permute.xlu0 %820
      %822 = vrot.lane.b32.xlu0 %v740, 110
      %v823 = vpop.permute.xlu0 %822
      %824 = vrot.lane.b32.xlu0 %v741, 110
      %v825 = vpop.permute.xlu0 %824
      %v826 = vsel %vm298, %v819, %v821
      %v827 = vsel %vm298, %v821, %v823
      %v828 = vsel %vm298, %v823, %v825
      %833 = vrot.lane.b32.xlu0 %v742, 18
      %v834 = vpop.permute.xlu0 %833
      %835 = vrot.lane.b32.xlu0 %v743, 18
      %v836 = vpop.permute.xlu0 %835
      %837 = vrot.lane.b32.xlu0 %v744, 18
      %v838 = vpop.permute.xlu0 %837
      %839 = vrot.lane.b32.xlu0 %v745, 18
      %v840 = vpop.permute.xlu0 %839
      %vm841 = vcmask 146432
      %v842 = vsel %vm841, %v834, %v836
      %v843 = vsel %vm841, %v836, %v838
      %v844 = vsel %vm841, %v838, %v840
      %845 = vrot.lane.b32.xlu0 %v742, 17
      %v846 = vpop.permute.xlu0 %845
      %847 = vrot.lane.b32.xlu0 %v743, 17
      %v848 = vpop.permute.xlu0 %847
      %849 = vrot.lane.b32.xlu0 %v744, 17
      %v850 = vpop.permute.xlu0 %849
      %851 = vrot.lane.b32.xlu0 %v745, 17
      %v852 = vpop.permute.xlu0 %851
      %vm853 = vcmask 138240
      %v854 = vsel %vm853, %v846, %v848
      %v855 = vsel %vm853, %v848, %v850
      %v856 = vsel %vm853, %v850, %v852
      %857 = vrot.lane.b32.xlu0 %v742, 127
      %v858 = vpop.permute.xlu0 %857
      %859 = vrot.lane.b32.xlu0 %v743, 127
      %v860 = vpop.permute.xlu0 %859
      %861 = vrot.lane.b32.xlu0 %v744, 127
      %v862 = vpop.permute.xlu0 %861
      %863 = vrot.lane.b32.xlu0 %v745, 127
      %v864 = vpop.permute.xlu0 %863
      %v865 = vsel %vm268, %v858, %v860
      %v866 = vsel %vm268, %v860, %v862
      %v867 = vsel %vm268, %v862, %v864
      %871 = vrot.lane.b32.xlu0 %v746, 19
      %v872 = vpop.permute.xlu0 %871
      %873 = vrot.lane.b32.xlu0 %v747, 19
      %v874 = vpop.permute.xlu0 %873
      %875 = vrot.lane.b32.xlu0 %v748, 19
      %v876 = vpop.permute.xlu0 %875
      %v877 = vsel %vm619, %v872, %v874
      %v878 = vsel %vm619, %v874, %v876
      %883 = vrot.lane.b32.xlu0 %v749, 18
      %v884 = vpop.permute.xlu0 %883
      %885 = vrot.lane.b32.xlu0 %v750, 18
      %v886 = vpop.permute.xlu0 %885
      %887 = vrot.lane.b32.xlu0 %v751, 18
      %v888 = vpop.permute.xlu0 %887
      %889 = vrot.lane.b32.xlu0 %v752, 18
      %v890 = vpop.permute.xlu0 %889
      %v891 = vsel %vm841, %v884, %v886
      %v892 = vsel %vm841, %v886, %v888
      %v893 = vsel %vm841, %v888, %v890
      %894 = vrot.lane.b32.xlu0 %v749, 1
      %v895 = vpop.permute.xlu0 %894
      %896 = vrot.lane.b32.xlu0 %v750, 1
      %v897 = vpop.permute.xlu0 %896
      %898 = vrot.lane.b32.xlu0 %v751, 1
      %v899 = vpop.permute.xlu0 %898
      %900 = vrot.lane.b32.xlu0 %v752, 1
      %v901 = vpop.permute.xlu0 %900
      %v902 = vsel %vm802, %v895, %v897
      %v903 = vsel %vm802, %v897, %v899
      %v904 = vsel %vm802, %v899, %v901
      %v905 = vld [vmem:[%s4] sm:$0xff]
      %v906 = vld [vmem:[%s4 + $0x8] sm:$0xff]
      %v907 = vld [vmem:[%s4 + $0x10] sm:$0xff]
      %v908 = vld [vmem:[%s4 + $0x18] sm:$0xff]
      %v909 = vld [vmem:[%s5] sm:$0xff]
      %v910 = vld [vmem:[%s5 + $0x8] sm:$0xff]
      %v911 = vld [vmem:[%s5 + $0x10] sm:$0xff]
      %v912 = vld [vmem:[%s5 + $0x18] sm:$0xff]
      %914 = vset.pattern.permute.xlu0 0
      %915 = vperm.xlu0 %914, %v909
      %v916 = vpop.permute.xlu0 %915
      %919 = vset.pattern.permute.xlu0 0
      %920 = vperm.xlu0 %919, %v910
      %v921 = vpop.permute.xlu0 %920
      %924 = vset.pattern.permute.xlu0 0
      %925 = vperm.xlu0 %924, %v911
      %v926 = vpop.permute.xlu0 %925
      %929 = vset.pattern.permute.xlu0 0
      %930 = vperm.xlu0 %929, %v912
      %v931 = vpop.permute.xlu0 %930
      %933 = vrot.lane.b32.xlu0 %v765, 109
      %v934 = vpop.permute.xlu0 %933
      %935 = vrot.lane.b32.xlu0 %v766, 109
      %v936 = vpop.permute.xlu0 %935
      %937 = vrot.lane.b32.xlu0 %v767, 109
      %v938 = vpop.permute.xlu0 %937
      %939 = vrot.lane.b32.xlu0 %v764, 109
      %v940 = vpop.permute.xlu0 %939
      %941 = vrot.lane.b32.xlu0 %v776, 109
      %v942 = vpop.permute.xlu0 %941
      %943 = vrot.lane.b32.xlu0 %v777, 109
      %v944 = vpop.permute.xlu0 %943
      %945 = vrot.lane.b32.xlu0 %v778, 109
      %v946 = vpop.permute.xlu0 %945
      %947 = vrot.lane.b32.xlu0 %v775, 109
      %v948 = vpop.permute.xlu0 %947
      %949 = vrot.lane.b32.xlu0 %v787, 109
      %v950 = vpop.permute.xlu0 %949
      %951 = vrot.lane.b32.xlu0 %v788, 109
      %v952 = vpop.permute.xlu0 %951
      %953 = vrot.lane.b32.xlu0 %v789, 109
      %v954 = vpop.permute.xlu0 %953
      %955 = vrot.lane.b32.xlu0 %v786, 109
      %v956 = vpop.permute.xlu0 %955
      %957 = vrot.lane.b32.xlu0 %v795, 109
      %v958 = vpop.permute.xlu0 %957
      %959 = vrot.lane.b32.xlu0 %v803, 109
      %v960 = vpop.permute.xlu0 %959
      %961 = vrot.lane.b32.xlu0 %v804, 109
      %v962 = vpop.permute.xlu0 %961
      %963 = vrot.lane.b32.xlu0 %v805, 109
      %v964 = vpop.permute.xlu0 %963
      %965 = vrot.lane.b32.xlu0 %v738, 109
      %v966 = vpop.permute.xlu0 %965
      %967 = vrot.lane.b32.xlu0 %v739, 109
      %v968 = vpop.permute.xlu0 %967
      %969 = vrot.lane.b32.xlu0 %v740, 109
      %v970 = vpop.permute.xlu0 %969
      %971 = vrot.lane.b32.xlu0 %v741, 109
      %v972 = vpop.permute.xlu0 %971
      %973 = vrot.lane.b32.xlu0 %v815, 109
      %v974 = vpop.permute.xlu0 %973
      %975 = vrot.lane.b32.xlu0 %v816, 109
      %v976 = vpop.permute.xlu0 %975
      %977 = vrot.lane.b32.xlu0 %v817, 109
      %v978 = vpop.permute.xlu0 %977
      %979 = vrot.lane.b32.xlu0 %v813, 109
      %v980 = vpop.permute.xlu0 %979
      %981 = vrot.lane.b32.xlu0 %v826, 109
      %v982 = vpop.permute.xlu0 %981
      %983 = vrot.lane.b32.xlu0 %v827, 109
      %v984 = vpop.permute.xlu0 %983
      %985 = vrot.lane.b32.xlu0 %v828, 109
      %v986 = vpop.permute.xlu0 %985
      %987 = vrot.lane.b32.xlu0 %v825, 109
      %v988 = vpop.permute.xlu0 %987
      %989 = vrot.lane.b32.xlu0 %v834, 109
      %v990 = vpop.permute.xlu0 %989
      %991 = vrot.lane.b32.xlu0 %v842, 109
      %v992 = vpop.permute.xlu0 %991
      %993 = vrot.lane.b32.xlu0 %v843, 109
      %v994 = vpop.permute.xlu0 %993
      %995 = vrot.lane.b32.xlu0 %v844, 109
      %v996 = vpop.permute.xlu0 %995
      %997 = vrot.lane.b32.xlu0 %v846, 109
      %v998 = vpop.permute.xlu0 %997
      %999 = vrot.lane.b32.xlu0 %v854, 109
      %v1000 = vpop.permute.xlu0 %999
      %1001 = vrot.lane.b32.xlu0 %v855, 109
      %v1002 = vpop.permute.xlu0 %1001
      %1003 = vrot.lane.b32.xlu0 %v856, 109
      %v1004 = vpop.permute.xlu0 %1003
      %1005 = vrot.lane.b32.xlu0 %v742, 109
      %v1006 = vpop.permute.xlu0 %1005
      %1007 = vrot.lane.b32.xlu0 %v743, 109
      %v1008 = vpop.permute.xlu0 %1007
      %1009 = vrot.lane.b32.xlu0 %v744, 109
      %v1010 = vpop.permute.xlu0 %1009
      %1011 = vrot.lane.b32.xlu0 %v745, 109
      %v1012 = vpop.permute.xlu0 %1011
      %1013 = vrot.lane.b32.xlu0 %v865, 109
      %v1014 = vpop.permute.xlu0 %1013
      %1015 = vrot.lane.b32.xlu0 %v866, 109
      %v1016 = vpop.permute.xlu0 %1015
      %1017 = vrot.lane.b32.xlu0 %v867, 109
      %v1018 = vpop.permute.xlu0 %1017
      %1019 = vrot.lane.b32.xlu0 %v864, 109
      %v1020 = vpop.permute.xlu0 %1019
      %1021 = vrot.lane.b32.xlu0 %v872, 109
      %v1022 = vpop.permute.xlu0 %1021
      %1023 = vrot.lane.b32.xlu0 %v877, 109
      %v1024 = vpop.permute.xlu0 %1023
      %1025 = vrot.lane.b32.xlu0 %v878, 109
      %v1026 = vpop.permute.xlu0 %1025
      %1027 = vrot.lane.b32.xlu0 %v876, 109
      %v1028 = vpop.permute.xlu0 %1027
      %1029 = vrot.lane.b32.xlu0 %v884, 109
      %v1030 = vpop.permute.xlu0 %1029
      %1031 = vrot.lane.b32.xlu0 %v891, 109
      %v1032 = vpop.permute.xlu0 %1031
      %1033 = vrot.lane.b32.xlu0 %v892, 109
      %v1034 = vpop.permute.xlu0 %1033
      %1035 = vrot.lane.b32.xlu0 %v893, 109
      %v1036 = vpop.permute.xlu0 %1035
      %1037 = vrot.lane.b32.xlu0 %v895, 109
      %v1038 = vpop.permute.xlu0 %1037
      %1039 = vrot.lane.b32.xlu0 %v902, 109
      %v1040 = vpop.permute.xlu0 %1039
      %1041 = vrot.lane.b32.xlu0 %v903, 109
      %v1042 = vpop.permute.xlu0 %1041
      %1043 = vrot.lane.b32.xlu0 %v904, 109
      %v1044 = vpop.permute.xlu0 %1043
      %1045 = vrot.lane.b32.xlu0 %v749, 109
      %v1046 = vpop.permute.xlu0 %1045
      %1047 = vrot.lane.b32.xlu0 %v750, 109
      %v1048 = vpop.permute.xlu0 %1047
      %1049 = vrot.lane.b32.xlu0 %v751, 109
      %v1050 = vpop.permute.xlu0 %1049
      %1051 = vrot.lane.b32.xlu0 %v752, 109
      %v1052 = vpop.permute.xlu0 %1051
      %v1053 = vsel %vm313, %v934, %v936
      %v1054 = vsel %vm313, %v936, %v938
      %v1055 = vsel %vm313, %v938, %v940
      %v1056 = vsel %vm313, %v942, %v944
      %v1057 = vsel %vm313, %v944, %v946
      %v1058 = vsel %vm313, %v946, %v948
      %v1059 = vsel %vm313, %v950, %v952
      %v1060 = vsel %vm313, %v952, %v954
      %v1061 = vsel %vm313, %v954, %v956
      %v1062 = vsel %vm313, %v958, %v960
      %v1063 = vsel %vm313, %v960, %v962
      %v1064 = vsel %vm313, %v962, %v964
      %v1065 = vsel %vm313, %v966, %v968
      %v1066 = vsel %vm313, %v968, %v970
      %v1067 = vsel %vm313, %v970, %v972
      %v1068 = vsel %vm313, %v974, %v976
      %v1069 = vsel %vm313, %v976, %v978
      %v1070 = vsel %vm313, %v978, %v980
      %v1071 = vsel %vm313, %v982, %v984
      %v1072 = vsel %vm313, %v984, %v986
      %v1073 = vsel %vm313, %v986, %v988
      %v1074 = vsel %vm313, %v990, %v992
      %v1075 = vsel %vm313, %v992, %v994
      %v1076 = vsel %vm313, %v994, %v996
      %v1077 = vsel %vm313, %v998, %v1000
      %v1078 = vsel %vm313, %v1000, %v1002
      %v1079 = vsel %vm313, %v1002, %v1004
      %v1080 = vsel %vm313, %v1006, %v1008
      %v1081 = vsel %vm313, %v1008, %v1010
      %v1082 = vsel %vm313, %v1010, %v1012
      %v1083 = vsel %vm313, %v1014, %v1016
      %v1084 = vsel %vm313, %v1016, %v1018
      %v1085 = vsel %vm313, %v1018, %v1020
      %v1086 = vsel %vm313, %v1022, %v1024
      %v1087 = vsel %vm313, %v1024, %v1026
      %v1088 = vsel %vm313, %v1026, %v1028
      %v1089 = vsel %vm313, %v1030, %v1032
      %v1090 = vsel %vm313, %v1032, %v1034
      %v1091 = vsel %vm313, %v1034, %v1036
      %v1092 = vsel %vm313, %v1038, %v1040
      %v1093 = vsel %vm313, %v1040, %v1042
      %v1094 = vsel %vm313, %v1042, %v1044
      %v1095 = vsel %vm313, %v1046, %v1048
      %v1096 = vsel %vm313, %v1048, %v1050
      %v1097 = vsel %vm313, %v1050, %v1052
      %1146 = vmatprep.subr.mxu0 %v788
      %1147 = vmatpush1.msra.mxu0 %v787
      %1148 = vmatprep.subr.mxu0 %v1054
      %1149 = vmatpush1.msra.mxu0 %v1053
      %1150 = vmatprep.subr.mxu0 %v1057
      %1151 = vmatpush1.msra.mxu0 %v1056
      %1152 = vmatprep.subr.mxu0 %v1060
      %1153 = vmatpush1.msra.mxu0 %v1059
      %1154 = vmatprep.subr.mxu0 %v1063
      %1155 = vmatpush1.msra.mxu0 %v1062
      %1156 = vmatprep.subr.mxu0 %v1066
      %1157 = vmatpush1.msra.mxu0 %v1065
      %1158 = vmatprep.subr.mxu0 %v1069
      %1159 = vmatpush1.msra.mxu0 %v1068
      %1160 = vmatprep.subr.mxu0 %v1072
      %1161 = vmatpush1.msra.mxu0 %v1071
      %1162 = vmatprep.subr.mxu0 %v1075
      %1163 = vmatpush1.msra.mxu0 %v1074
      %1164 = vmatprep.subr.mxu0 %v1078
      %1165 = vmatpush1.msra.mxu0 %v1077
      %1166 = vmatprep.subr.mxu0 %v1081
      %1167 = vmatpush1.msra.mxu0 %v1080
      %1168 = vmatprep.subr.mxu0 %v1084
      %1169 = vmatpush1.msra.mxu0 %v1083
      %1170 = vmatprep.subr.mxu0 %v1087
      %1171 = vmatpush1.msra.mxu0 %v1086
      %1172 = vmatprep.subr.mxu0 %v1090
      %1173 = vmatpush1.msra.mxu0 %v1089
      %1174 = vmatprep.subr.mxu0 %v1093
      %1175 = vmatpush1.msra.mxu0 %v1092
      %1176 = vmatprep.subr.mxu0 %v1096
      %1177 = vmatpush1.msra.mxu0 %v1095
      %1178 = vmatprep.subr.mxu0 0.0
      %1179 = vmatpush1.msra.mxu0 0.0
      %1180 = vmatprep.subr.mxu0 0.0
      %1181 = vmatpush1.msra.mxu0 0.0
      %1182 = vmatprep.subr.mxu0 0.0
      %1183 = vmatpush1.msra.mxu0 0.0
      %1184 = vmatprep.subr.mxu0 0.0
      %1185 = vmatpush1.msra.mxu0 0.0
      %1186 = vmatprep.subr.mxu0 0.0
      %1187 = vmatpush1.msra.mxu0 0.0
      %1188 = vmatprep.subr.mxu0 0.0
      %1189 = vmatpush1.msra.mxu0 0.0
      %1190 = vmatprep.subr.mxu0 0.0
      %1191 = vmatpush1.msra.mxu0 0.0
      %1192 = vmatprep.subr.mxu0 0.0
      %1193 = vmatpush1.msra.mxu0 0.0
      %1194 = vmatprep.subr.mxu0 0.0
      %1195 = vmatpush1.msra.mxu0 0.0
      %1196 = vmatprep.subr.mxu0 0.0
      %1197 = vmatpush1.msra.mxu0 0.0
      %1198 = vmatprep.subr.mxu0 0.0
      %1199 = vmatpush1.msra.mxu0 0.0
      %1200 = vmatprep.subr.mxu0 0.0
      %1201 = vmatpush1.msra.mxu0 0.0
      %1202 = vmatprep.subr.mxu0 0.0
      %1203 = vmatpush1.msra.mxu0 0.0
      %1204 = vmatprep.subr.mxu0 0.0
      %1205 = vmatpush1.msra.mxu0 0.0
      %1206 = vmatprep.subr.mxu0 0.0
      %1207 = vmatpush1.msra.mxu0 0.0
      %1208 = vmatprep.subr.mxu0 0.0
      %1209 = vmatpush1.msra.mxu0 0.0
      %1210 = vmatprep.mubr.f32.mxu0 0.0
      %1211 = vmatmul.mubr.f32.gmra.mrb[0].mxu0 %v905
      %v1212 = vpop.f32.mrb[0].mxu0
      %v1213 = vadd.f32 %v916, %v1212
      %v1214 = vpop.f32.mrb[0].mxu0
      %v1215 = vadd.f32 %v916, %v1214
      %1216 = vmatprep.mubr.f32.mxu0 0.0
      %1217 = vmatmul.mubr.f32.gmra.mrb[0].mxu0 %v906
      %v1218 = vpop.f32.mrb[0].mxu0
      %v1219 = vadd.f32 %v921, %v1218
      %v1220 = vpop.f32.mrb[0].mxu0
      %v1221 = vadd.f32 %v921, %v1220
      %1222 = vmatprep.mubr.f32.mxu0 0.0
      %1223 = vmatmul.mubr.f32.gmra.mrb[0].mxu0 %v907
      %v1224 = vpop.f32.mrb[0].mxu0
      %v1225 = vadd.f32 %v926, %v1224
      %v1226 = vpop.f32.mrb[0].mxu0
      %v1227 = vadd.f32 %v926, %v1226
      %1228 = vmatprep.mubr.f32.mxu0 0.0
      %1229 = vmatmul.mubr.f32.gmra.mrb[0].mxu0 %v908
      %v1230 = vpop.f32.mrb[0].mxu0
      %v1231 = vadd.f32 %v931, %v1230
      %v1232 = vpop.f32.mrb[0].mxu0
      %v1233 = vadd.f32 %v931, %v1232
      %1234 = vdwg.mxu0
      %1235 = vmatprep.subr.mxu0 0.0
      %1236 = vmatpush1.msra.mxu0 %v789
      %1237 = vmatprep.subr.mxu0 0.0
      %1238 = vmatpush1.msra.mxu0 %v1055
      %1239 = vmatprep.subr.mxu0 0.0
      %1240 = vmatpush1.msra.mxu0 %v1058
      %1241 = vmatprep.subr.mxu0 0.0
      %1242 = vmatpush1.msra.mxu0 %v1061
      %1243 = vmatprep.subr.mxu0 0.0
      %1244 = vmatpush1.msra.mxu0 %v1064
      %1245 = vmatprep.subr.mxu0 0.0
      %1246 = vmatpush1.msra.mxu0 %v1067
      %1247 = vmatprep.subr.mxu0 0.0
      %1248 = vmatpush1.msra.mxu0 %v1070
      %1249 = vmatprep.subr.mxu0 0.0
      %1250 = vmatpush1.msra.mxu0 %v1073
      %1251 = vmatprep.subr.mxu0 0.0
      %1252 = vmatpush1.msra.mxu0 %v1076
      %1253 = vmatprep.subr.mxu0 0.0
      %1254 = vmatpush1.msra.mxu0 %v1079
      %1255 = vmatprep.subr.mxu0 0.0
      %1256 = vmatpush1.msra.mxu0 %v1082
      %1257 = vmatprep.subr.mxu0 0.0
      %1258 = vmatpush1.msra.mxu0 %v1085
      %1259 = vmatprep.subr.mxu0 0.0
      %1260 = vmatpush1.msra.mxu0 %v1088
      %1261 = vmatprep.subr.mxu0 0.0
      %1262 = vmatpush1.msra.mxu0 %v1091
      %1263 = vmatprep.subr.mxu0 0.0
      %1264 = vmatpush1.msra.mxu0 %v1094
      %1265 = vmatprep.subr.mxu0 0.0
      %1266 = vmatpush1.msra.mxu0 %v1097
      %1267 = vmatprep.subr.mxu0 0.0
      %1268 = vmatpush1.msra.mxu0 0.0
      %1269 = vmatprep.subr.mxu0 0.0
      %1270 = vmatpush1.msra.mxu0 0.0
      %1271 = vmatprep.subr.mxu0 0.0
      %1272 = vmatpush1.msra.mxu0 0.0
      %1273 = vmatprep.subr.mxu0 0.0
      %1274 = vmatpush1.msra.mxu0 0.0
      %1275 = vmatprep.subr.mxu0 0.0
      %1276 = vmatpush1.msra.mxu0 0.0
      %1277 = vmatprep.subr.mxu0 0.0
      %1278 = vmatpush1.msra.mxu0 0.0
      %1279 = vmatprep.subr.mxu0 0.0
      %1280 = vmatpush1.msra.mxu0 0.0
      %1281 = vmatprep.subr.mxu0 0.0
      %1282 = vmatpush1.msra.mxu0 0.0
      %1283 = vmatprep.subr.mxu0 0.0
      %1284 = vmatpush1.msra.mxu0 0.0
      %1285 = vmatprep.subr.mxu0 0.0
      %1286 = vmatpush1.msra.mxu0 0.0
      %1287 = vmatprep.subr.mxu0 0.0
      %1288 = vmatpush1.msra.mxu0 0.0
      %1289 = vmatprep.subr.mxu0 0.0
      %1290 = vmatpush1.msra.mxu0 0.0
      %1291 = vmatprep.subr.mxu0 0.0
      %1292 = vmatpush1.msra.mxu0 0.0
      %1293 = vmatprep.subr.mxu0 0.0
      %1294 = vmatpush1.msra.mxu0 0.0
      %1295 = vmatprep.subr.mxu0 0.0
      %1296 = vmatpush1.msra.mxu0 0.0
      %1297 = vmatprep.subr.mxu0 0.0
      %1298 = vmatpush1.msra.mxu0 0.0
      %1299 = vmatprep.mubr.f32.mxu0 0.0
      %1300 = vmatmul.mubr.f32.gmra.mrb[0].mxu0 %v905
      %v1301 = vpop.f32.mrb[0].mxu0
      %v1302 = vadd.f32 %v916, %v1301
      %v1303 = vpop.f32.mrb[0].mxu0
      %1304 = vmatprep.mubr.f32.mxu0 0.0
      %1305 = vmatmul.mubr.f32.gmra.mrb[0].mxu0 %v906
      %v1306 = vpop.f32.mrb[0].mxu0
      %v1307 = vadd.f32 %v921, %v1306
      %v1308 = vpop.f32.mrb[0].mxu0
      %1309 = vmatprep.mubr.f32.mxu0 0.0
      %1310 = vmatmul.mubr.f32.gmra.mrb[0].mxu0 %v907
      %v1311 = vpop.f32.mrb[0].mxu0
      %v1312 = vadd.f32 %v926, %v1311
      %v1313 = vpop.f32.mrb[0].mxu0
      %1314 = vmatprep.mubr.f32.mxu0 0.0
      %1315 = vmatmul.mubr.f32.gmra.mrb[0].mxu0 %v908
      %v1316 = vpop.f32.mrb[0].mxu0
      %v1317 = vadd.f32 %v931, %v1316
      %v1318 = vpop.f32.mrb[0].mxu0
      %1319 = vdwg.mxu0
      %v1320 = vmul.f32 %v1213, 0.2
      %v1321 = vmul.f32 %v1215, 0.2
      %v1322 = vmul.f32 %v1302, 0.2
      %v1323 = vmul.f32 %v1219, 0.2
      %v1324 = vmul.f32 %v1221, 0.2
      %v1325 = vmul.f32 %v1307, 0.2
      %v1326 = vmul.f32 %v1225, 0.2
      %v1327 = vmul.f32 %v1227, 0.2
      %v1328 = vmul.f32 %v1312, 0.2
      %v1329 = vmul.f32 %v1231, 0.2
      %v1330 = vmul.f32 %v1233, 0.2
      %v1331 = vmul.f32 %v1317, 0.2
      %v1332 = vmax.f32 %v1213, %v1320
      %v1333 = vmax.f32 %v1215, %v1321
      %v1334 = vmax.f32 %v1302, %v1322
      %v1335 = vmax.f32 %v1219, %v1323
      %v1336 = vmax.f32 %v1221, %v1324
      %v1337 = vmax.f32 %v1307, %v1325
      %v1338 = vmax.f32 %v1225, %v1326
      %v1339 = vmax.f32 %v1227, %v1327
      %v1340 = vmax.f32 %v1312, %v1328
      %v1341 = vmax.f32 %v1231, %v1329
      %v1342 = vmax.f32 %v1233, %v1330
      %v1343 = vmax.f32 %v1317, %v1331
      %1344 = vst [vmem:[%s251] sm:$0xff] %v1332
      %1345 = vst [vmem:[%s251 + $0x8] sm:$0xff] %v1333
      %1346 = vst [vmem:[%s251 + $0x10] sm:$0xff] %v1334
      %1347 = vst [vmem:[%s251 + $0x18] sm:$0xff] %v1335
      %1348 = vst [vmem:[%s251 + $0x20] sm:$0xff] %v1336
      %1349 = vst [vmem:[%s251 + $0x28] sm:$0xff] %v1337
      %1350 = vst [vmem:[%s251 + $0x30] sm:$0xff] %v1338
      %1351 = vst [vmem:[%s251 + $0x38] sm:$0xff] %v1339
      %1352 = vst [vmem:[%s251 + $0x40] sm:$0xff] %v1340
      %1353 = vst [vmem:[%s251 + $0x48] sm:$0xff] %v1341
      %1354 = vst [vmem:[%s251 + $0x50] sm:$0xff] %v1342
      %1355 = vst [vmem:[%s251 + $0x58] sm:$0xff] %v1343
      %p1356 = scmp.lt.s32.totalorder %s17, 1
      %s1357 = scalar_select %p1356, %s17, 1
      %s1358 = smul.addr %s1357, 12
      %s1359 = smul.addr %s1358, 8
      %s1360 = scalar_lea.vmem %s6, %s1359
      // Predicated region
      $region45: #{double_conv_up.1} parent=43 // pred_check
        %p1361 = pneg %p166
      $region46: #{double_conv_up.1} parent=43 // pred_check_branch
        %1363 = sbr.rel (%p1361) target = $region48
      $region47: #{double_conv_up.1} parent=43 // pred_region
        _
      $region48: #{double_conv_up.1} parent=43 // pred_fallthru
        _
    $region44: #{double_conv_up.1} parent=5 // pred_fallthru
      _
    %p1364 = scmp.le.s32.totalorder 2, %s12
    // Predicated region
    $region49: #{double_conv_up.1} parent=5 // pred_check
      %p1365 = pneg %p1364
    $region50: #{double_conv_up.1} parent=5 // pred_check_branch
      %1367 = sbr.rel (%p1365) target = $region52
    $region51: #{double_conv_up.1} parent=5 // pred_region
      %s1368 = ssub.s32 %s12, 2
      // Predicated region
      $region53: #{double_conv_up.1} parent=51 // pred_check
        %p1369 = pneg %p172
      $region54: #{double_conv_up.1} parent=51 // pred_check_branch
        %1371 = sbr.rel (%p1369) target = $region56
      $region55: #{double_conv_up.1} parent=51 // pred_region
        %p1372 = scmp.lt.s32.totalorder %s18, 1
        %s1373 = scalar_select %p1372, %s18, 1
        %s1374 = smul.addr %s1373, 12
        %s1375 = smul.addr %s1374, 8
        %s1376 = scalar_lea.vmem %s6, %s1375
      $region56: #{double_conv_up.1} parent=51 // pred_fallthru
        _
    $region52: #{double_conv_up.1} parent=5 // pred_fallthru
      _
  $region6: #{double_conv_up.1} parent=0 // loop_footer
    %s16 = sadd.s32 1, %s12
  $region7: #{double_conv_up.1} parent=0 // loop_footer_branch
    %11 = sbr.rel target = $region3
  $region8: #{double_conv_up.1} parent=0 // loop_exit
    _

</llo_original>
